<compile_context>
chip_gen: v6e
topology: v6e:2x2x1
jax: 0.10.0
libtpu: 0.0.40
codegen_flags: <defaults>
</compile_context>

<pallas_src>
import functools

import jax
import jax.numpy as jnp
from jax.experimental import pallas as pl
from jax.experimental.pallas import tpu as pltpu

DIN = 8      # model input features: [cx, cy, cz, n, l, m, 1(bias), 0]
H = 32       # hidden width of the synthetic WfcNN MLP
DOUT = 8     # model output lanes (cols 0/1 = real/imag)
ACT_W = 16   # packed activation lanes
W_ROWS = 48  # packed weight-slab sublanes


def _round_up(v, m):
    return (v + m - 1) // m * m


# ----------------------------------------------------------------------------- params packing
def pack_wfc_params(params):
    """Pack (w1t, b1, w2t, b2) into one [48, 32] f32 slab (single DMA, cache across steps)."""
    w1t, b1, w2t, b2 = params
    w1a = w1t.astype(jnp.float32).at[6, :].set(b1.astype(jnp.float32).reshape(-1))
    slab = jnp.zeros((W_ROWS, H), jnp.float32)
    slab = slab.at[0:DIN, :].set(w1a)
    slab = slab.at[8, 0:DOUT].set(b2.astype(jnp.float32).reshape(-1))
    slab = slab.at[16:16 + H, 0:DOUT].set(w2t.astype(jnp.float32))
    return slab


# ----------------------------------------------------------------------------- kernel
def _losses_kernel(act_ref, w_ref, out_ref, acc_ref, *, tb, b_actual, needs_mask,
                   hbar, mass, lam_sch, lam_sup, lam_norm, has_sup, has_norm):
    pid = pl.program_id(0)
    nsteps = pl.num_programs(0)

    @pl.when(pid == 0)
    def _init():
        acc_ref[...] = jnp.zeros_like(acc_ref)

    # ---- packed weights (static, aligned slices) ------------------------------
    w1a = w_ref[0:DIN, :]            # [8, 32]  W1^T with b1 folded into row 6
    b2row = w_ref[8:9, :]            # [1, 32]  b2 padded with zeros
    w2p = w_ref[16:16 + H, :]        # [32, 32] W2^T padded with zero lanes

    # ---- model forward ---------------------------------------------------------
    x = act_ref[:, 0:DIN]                                            # [TB, 8]
    z = jnp.dot(x, w1a, preferred_element_type=jnp.float32)          # [TB, H]
    h = jnp.tanh(z)

    # ---- analytic Laplacian over the 3 spatial coordinates ---------------------
    #   d^2 psi_k / d c_d^2 = sum_j W2[k, j] * tanh''(z_j) * W1[j, d]^2
    s = jnp.sum(w1a[0:3, :] * w1a[0:3, :], axis=0, keepdims=True)    # [1, H]
    g = -2.0 * h * (1.0 - h * h)                                     # tanh'' at z
    # fold psi- and lap-matmuls against W2^T into one MXU dot
    hg = jnp.concatenate([h, g * s], axis=0)                         # [2*TB, H]
    pp = jnp.dot(hg, w2p, preferred_element_type=jnp.float32)        # [2*TB, 32]
    psi = pp[0:tb, :] + b2row
    lap = pp[tb:2 * tb, :]
    psi_r = psi[:, 0:1]
    psi_i = psi[:, 1:2]
    lap_r = lap[:, 0:1]
    lap_i = lap[:, 1:2]

    # ---- potential & Hamiltonian ------------------------------------------------
    r2 = (act_ref[:, 0:1] ** 2 + act_ref[:, 1:2] ** 2 + act_ref[:, 2:3] ** 2)
    r = jnp.maximum(jnp.sqrt(r2), 1e-8)
    V = -1.0 / r
    kin = -(hbar * hbar) / (2.0 * mass)
    H_r = kin * lap_r + V * psi_r
    H_i = kin * lap_i + V * psi_i

    # ---- per-sample statistics, fused into one reduction ------------------------
    st_num = psi_r * H_r + psi_i * H_i          # <psi|H|psi> contribution
    st_den = psi_r * psi_r + psi_i * psi_i      # |psi|^2
    st_h2 = H_r * H_r + H_i * H_i               # |H psi|^2
    if has_sup:
        t_r = act_ref[:, 8:9]
        t_i = act_ref[:, 9:10]
        st_sup = (psi_r - t_r) ** 2 + (psi_i - t_i) ** 2
    else:
        st_sup = jnp.zeros_like(st_num)
    if has_norm:
        pdf = act_ref[:, 10:11]
        st_nrm = st_den / (pdf + 1e-12)
    else:
        st_nrm = jnp.zeros_like(st_num)

    stats = jnp.concatenate(
        [st_num, st_den, st_h2, st_sup, st_nrm,
         jnp.zeros((tb, 3), jnp.float32)], axis=1)                   # [TB, 8]
    if needs_mask:  # only generated when B is not a multiple of the tile
        rows = jax.lax.broadcasted_iota(jnp.int32, (tb, 8), 0) + pid * tb
        stats = jnp.where(rows < b_actual, stats, 0.0)
    acc_ref[...] += jnp.sum(stats, axis=0, keepdims=True)            # [1, 8]

    # ---- finalize losses once, on the last tile ---------------------------------
    @pl.when(pid == nsteps - 1)
    def _finalize():
        S = acc_ref[...]
        inv_b = 1.0 / b_actual
        m_num = S[:, 0:1] * inv_b
        m_den = S[:, 1:2] * inv_b
        m_h2 = S[:, 2:3] * inv_b
        E = m_num / (m_den + 1e-12)
        # mean((H - E psi)^2) expanded with the already-accumulated moments
        sch = m_h2 - 2.0 * E * m_num + E * E * m_den
        if has_sup:
            sup = S[:, 3:4] * inv_b
        else:
            sup = jnp.zeros_like(E)
        if has_norm:
            nrm = (S[:, 4:5] * inv_b - 1.0) ** 2
        else:
            nrm = jnp.zeros_like(E)
        total = lam_sch * sch + lam_sup * sup + lam_norm * nrm

        lane = jax.lax.broadcasted_iota(jnp.int32, (1, 8), 1)
        out_ref[...] = (jnp.where(lane == 0, total, 0.0)
                        + jnp.where(lane == 1, sch, 0.0)
                        + jnp.where(lane == 2, sup, 0.0)
                        + jnp.where(lane == 3, nrm, 0.0)
                        + jnp.where(lane == 4, E, 0.0)).astype(jnp.float32)


# ----------------------------------------------------------------------------- wrapper
def losses_forward(packed_w, coords, n, l, m, psi_true_real=None, psi_true_imag=None,
                   pdf_vals=None, hbar=1.0, mass=1.0,
                   lambda_sch=1.0, lambda_sup=1.0, lambda_norm=1.0, tile_b=128):
    b_actual = coords.shape[0]
    has_sup = (psi_true_real is not None) and (psi_true_imag is not None)
    has_norm = pdf_vals is not None

    tb = min(int(tile_b), _round_up(b_actual, 8))
    b_pad = _round_up(b_actual, tb)
    nb = b_pad // tb
    needs_mask = (b_pad != b_actual)

    # ---- pack activations into a single [B_pad, 16] slab (one HBM operand) ------
    def col(v):
        return jnp.broadcast_to(jnp.asarray(v, jnp.float32).reshape(-1),
                                (b_actual,))[:, None]

    zeros1 = jnp.zeros((b_actual, 1), jnp.float32)
    cols = [coords.astype(jnp.float32),                  # 0:3
            col(n), col(l), col(m),                      # 3,4,5
            jnp.ones((b_actual, 1), jnp.float32),        # 6  bias feature
            zeros1,                                      # 7
            col(psi_true_real) if has_sup else zeros1,   # 8
            col(psi_true_imag) if has_sup else zeros1,   # 9
            col(pdf_vals) if has_norm else jnp.ones((b_actual, 1), jnp.float32),  # 10
            jnp.zeros((b_actual, ACT_W - 11), jnp.float32)]                        # 11:16
    act = jnp.concatenate(cols, axis=1)
    if needs_mask:
        act = jnp.pad(act, ((0, b_pad - b_actual), (0, 0)))

    kernel = functools.partial(
        _losses_kernel, tb=tb, b_actual=b_actual, needs_mask=needs_mask,
        hbar=float(hbar), mass=float(mass),
        lam_sch=float(lambda_sch), lam_sup=float(lambda_sup),
        lam_norm=float(lambda_norm), has_sup=has_sup, has_norm=has_norm)

    out = pl.pallas_call(
        kernel,
        grid=(nb,),
        in_specs=[pl.BlockSpec((tb, ACT_W), lambda i: (i, 0)),    # activations tile
                  pl.BlockSpec((W_ROWS, H), lambda i: (0, 0))],   # weight slab (resident)
        out_specs=pl.BlockSpec((1, 8), lambda i: (0, 0)),
        out_shape=jax.ShapeDtypeStruct((1, 8), jnp.float32),
        scratch_shapes=[pltpu.VMEM((1, 8), jnp.float32)],         # running sums
        compiler_params=pltpu.CompilerParams(
            dimension_semantics=("arbitrary",)),
    )(act, packed_w)

    total_loss = out[0, 0]
    loss_dict = {
        "schrodinger_loss": out[0, 1],
        "supervised_loss": out[0, 2],
        "normalization_loss": out[0, 3],
        "energy_estimate": out[0, 4],
    }
    return total_loss, loss_dict


# ----------------------------------------------------------------------------- pure-JAX reference (autodiff Laplacian)
def _model_apply(params, x):
    w1t, b1, w2t, b2 = params
    return jnp.tanh(x @ w1t + b1) @ w2t + b2


def reference_forward(params, coords, n, l, m, psi_true_real, psi_true_imag, pdf_vals,
                      hbar=1.0, mass=1.0, lam_sch=1.0, lam_sup=1.0, lam_norm=1.0):
    b = coords.shape[0]
    nlm = jnp.stack([jnp.broadcast_to(jnp.asarray(q, jnp.float32), (b,))
                     for q in (n, l, m)], axis=1)
    extra = jnp.concatenate([nlm, jnp.zeros((b, DIN - 6), jnp.float32)], axis=1)

    def psi_fn(c3, e):
        xi = jnp.concatenate([c3, e])[None, :]
        return _model_apply(params, xi)[0, :2]

    def lap_fn(c3, e):
        hess = jax.hessian(lambda c: psi_fn(c, e))(c3)   # (2, 3, 3)
        return jnp.trace(hess, axis1=1, axis2=2)          # (2,)

    lap = jax.vmap(lap_fn)(coords, extra)                 # [B, 2]
    x = jnp.concatenate([coords, extra], axis=1)
    psi = _model_apply(params, x)[:, :2]
    psi_r, psi_i = psi[:, 0], psi[:, 1]
    lap_r, lap_i = lap[:, 0], lap[:, 1]

    r = jnp.maximum(jnp.linalg.norm(coords, axis=1), 1e-8)
    V = -1.0 / r
    kin = -(hbar ** 2) / (2.0 * mass)
    H_r = kin * lap_r + V * psi_r
    H_i = kin * lap_i + V * psi_i
    num = jnp.mean(psi_r * H_r + psi_i * H_i)
    den = jnp.mean(psi_r ** 2 + psi_i ** 2) + 1e-12
    E = num / den
    sch = jnp.mean((H_r - E * psi_r) ** 2 + (H_i - E * psi_i) ** 2)
    sup = jnp.mean((psi_r - psi_true_real) ** 2 + (psi_i - psi_true_imag) ** 2)
    nrm = (jnp.mean((psi_r ** 2 + psi_i ** 2) / (pdf_vals + 1e-12)) - 1.0) ** 2
    total = lam_sch * sch + lam_sup * sup + lam_norm * nrm
    return total, {"schrodinger_loss": sch, "supervised_loss": sup,
                   "normalization_loss": nrm, "energy_estimate": E}


# ----------------------------------------------------------------------------- main
if __name__ == "__main__":
    key = jax.random.PRNGKey(0)
    k1, k2, k3, k4, k5, k6, k7 = jax.random.split(key, 7)

    # deterministic synthetic WfcNN parameters
    w1t = jax.random.normal(k1, (DIN, H), jnp.float32) * 0.3
    b1 = jax.random.normal(k2, (1, H), jnp.float32) * 0.1
    w2t = jax.random.normal(k3, (H, DOUT), jnp.float32) * 0.3
    b2 = jax.random.normal(k4, (1, DOUT), jnp.float32) * 0.1
    params = (w1t, b1, w2t, b2)

    # inputs — B=200 exercises the batch tiling (128-row tiles) and the last-tile mask
    Bn = 200
    coords = jax.random.normal(k5, (Bn, 3), jnp.float32)
    n = jnp.full((Bn,), 1.0, jnp.float32)
    l = jnp.zeros((Bn,), jnp.float32)
    m = jnp.zeros((Bn,), jnp.float32)
    psi_true_real = jax.random.normal(k6, (Bn,), jnp.float32) * 0.1
    psi_true_imag = jax.random.normal(k7, (Bn,), jnp.float32) * 0.1
    pdf_vals = jnp.full((Bn,), 0.5, jnp.float32)

    packed_w = pack_wfc_params(params)        # done once, reused across training steps
    fwd = jax.jit(losses_forward)
    total, loss_dict = fwd(packed_w, coords, n, l, m,
                           psi_true_real, psi_true_imag, pdf_vals)
    jax.block_until_ready(total)

    # correctness check vs. pure-JAX autodiff reference
    # TODO(synk): matmuls stay f32 for exact parity; bf16 inputs (f32 accumulate) are a
    # further v6e/v7x speedup if the looser tolerance is acceptable.
    ref_total, ref_dict = reference_forward(params, coords, n, l, m,
                                            psi_true_real, psi_true_imag, pdf_vals)
    assert jnp.allclose(total, ref_total, rtol=2e-3, atol=1e-5), (total, ref_total)
    for k in ("schrodinger_loss", "supervised_loss", "normalization_loss",
              "energy_estimate"):
        assert jnp.allclose(loss_dict[k], ref_dict[k], rtol=2e-3, atol=1e-5), (
            k, loss_dict[k], ref_dict[k])

    print("KERNEL_OK")
</pallas_src>

<mosaic_0001>
module attributes {stable_mosaic.version = 11 : i64} {
  func.func @_losses_kernel(%arg0: i32, %arg1: memref<128x16xf32, #tpu.memory_space<vmem>>, %arg2: memref<48x32xf32, #tpu.memory_space<vmem>>, %arg3: memref<1x8xf32, #tpu.memory_space<vmem>>, %arg4: memref<1x8xf32, #tpu.memory_space<vmem>>) attributes {dimension_semantics = [#tpu.dimension_semantics<arbitrary>], iteration_bounds = array<i64: 2>, scalar_prefetch = 0 : i64, scratch_operands = 1 : i64, tpu.core_type = #tpu.core_type<tc>, window_params = [{transform_indices = @transform_0, window_bounds = array<i64: 128, 16>}, {pipeline_mode = #tpu.pipeline_mode<synchronous>, transform_indices = @transform_1, window_bounds = array<i64: 48, 32>}, {pipeline_mode = #tpu.pipeline_mode<synchronous>, transform_indices = @transform_2, window_bounds = array<i64: 1, 8>}]} {
    %c0_i32 = arith.constant 0 : i32
    %0 = arith.cmpi eq, %arg0, %c0_i32 : i32
    %1 = arith.extui %0 : i1 to i32
    %c0_i32_0 = arith.constant 0 : i32
    %2 = arith.cmpi ne, %1, %c0_i32_0 : i32
    scf.if %2 {
      %cst_31 = arith.constant 0.000000e+00 : f32
      %91 = vector.broadcast %cst_31 : f32 to vector<1x8xf32>
      %c0_32 = arith.constant 0 : index
      %c0_33 = arith.constant 0 : index
      %92 = vector.load %arg4[%c0_32, %c0_33] : memref<1x8xf32, #tpu.memory_space<vmem>>, vector<1x8xf32>
      tpu.vector_store %arg4[%c0_32, %c0_33], %91 {strides = array<i32>} : memref<1x8xf32, #tpu.memory_space<vmem>>, vector<1x8xf32>,
    } else {
    }
    %c0 = arith.constant 0 : index
    %c0_1 = arith.constant 0 : index
    %3 = vector.load %arg2[%c0, %c0_1] : memref<48x32xf32, #tpu.memory_space<vmem>>, vector<8x32xf32>
    %c8 = arith.constant 8 : index
    %c0_2 = arith.constant 0 : index
    %4 = vector.load %arg2[%c8, %c0_2] : memref<48x32xf32, #tpu.memory_space<vmem>>, vector<1x32xf32>
    %c16 = arith.constant 16 : index
    %c0_3 = arith.constant 0 : index
    %5 = vector.load %arg2[%c16, %c0_3] : memref<48x32xf32, #tpu.memory_space<vmem>>, vector<32x32xf32>
    %c0_4 = arith.constant 0 : index
    %c0_5 = arith.constant 0 : index
    %6 = vector.load %arg1[%c0_4, %c0_5] : memref<128x16xf32, #tpu.memory_space<vmem>>, vector<128x8xf32>
    %cst = arith.constant dense<0.000000e+00> : vector<128x32xf32>
    %7 = tpu.matmul %6, %3, %cst {dimension_numbers = #tpu.dot_dimension_numbers<[1], [0], [0], [1], [0, 0, 1, 1], [], []>} : vector<128x8xf32>, vector<8x32xf32>, vector<128x32xf32> -> vector<128x32xf32>
    %8 = math.tanh %7 : vector<128x32xf32>
    %9 = vector.extract_strided_slice %3 {offsets = [0, 0], sizes = [3, 32], strides = [1, 1]} : vector<8x32xf32> to vector<3x32xf32>
    %10 = vector.extract_strided_slice %3 {offsets = [0, 0], sizes = [3, 32], strides = [1, 1]} : vector<8x32xf32> to vector<3x32xf32>
    %11 = arith.mulf %9, %10 : vector<3x32xf32>
    %cst_6 = arith.constant dense<0.000000e+00> : vector<32xf32>
    %12 = vector.multi_reduction <add>, %11, %cst_6 [0] : vector<3x32xf32> to vector<32xf32>
    %13 = vector.shape_cast %12 : vector<32xf32> to vector<1x32xf32>
    %cst_7 = arith.constant -2.000000e+00 : f32
    %14 = vector.broadcast %cst_7 : f32 to vector<128x32xf32>
    %15 = arith.mulf %14, %8 : vector<128x32xf32>
    %16 = arith.mulf %8, %8 : vector<128x32xf32>
    %cst_8 = arith.constant 1.000000e+00 : f32
    %17 = vector.broadcast %cst_8 : f32 to vector<128x32xf32>
    %18 = arith.subf %17, %16 : vector<128x32xf32>
    %19 = arith.mulf %15, %18 : vector<128x32xf32>
    %20 = vector.broadcast %13 : vector<1x32xf32> to vector<128x32xf32>
    %21 = arith.mulf %19, %20 : vector<128x32xf32>
    %22 = tpu.concatenate %8, %21 in 0 : vector<128x32xf32>, vector<128x32xf32> -> vector<256x32xf32>
    %cst_9 = arith.constant dense<0.000000e+00> : vector<256x32xf32>
    %23 = tpu.matmul %22, %5, %cst_9 {dimension_numbers = #tpu.dot_dimension_numbers<[1], [0], [0], [1], [0, 0, 1, 1], [], []>} : vector<256x32xf32>, vector<32x32xf32>, vector<256x32xf32> -> vector<256x32xf32>
    %24 = vector.extract_strided_slice %23 {offsets = [0, 0], sizes = [128, 32], strides = [1, 1]} : vector<256x32xf32> to vector<128x32xf32>
    %25 = vector.broadcast %4 : vector<1x32xf32> to vector<128x32xf32>
    %26 = arith.addf %24, %25 : vector<128x32xf32>
    %27 = vector.extract_strided_slice %23 {offsets = [128, 0], sizes = [128, 32], strides = [1, 1]} : vector<256x32xf32> to vector<128x32xf32>
    %28 = vector.extract_strided_slice %26 {offsets = [0, 0], sizes = [128, 1], strides = [1, 1]} : vector<128x32xf32> to vector<128x1xf32>
    %29 = vector.extract_strided_slice %26 {offsets = [0, 1], sizes = [128, 1], strides = [1, 1]} : vector<128x32xf32> to vector<128x1xf32>
    %30 = vector.extract_strided_slice %27 {offsets = [0, 0], sizes = [128, 1], strides = [1, 1]} : vector<128x32xf32> to vector<128x1xf32>
    %31 = vector.extract_strided_slice %27 {offsets = [0, 1], sizes = [128, 1], strides = [1, 1]} : vector<128x32xf32> to vector<128x1xf32>
    %c0_10 = arith.constant 0 : index
    %c0_11 = arith.constant 0 : index
    %32 = vector.load %arg1[%c0_10, %c0_11] : memref<128x16xf32, #tpu.memory_space<vmem>>, vector<128x1xf32>
    %33 = arith.mulf %32, %32 : vector<128x1xf32>
    %c0_12 = arith.constant 0 : index
    %c1 = arith.constant 1 : index
    %34 = vector.load %arg1[%c0_12, %c1] : memref<128x16xf32, #tpu.memory_space<vmem>>, vector<128x1xf32>
    %35 = arith.mulf %34, %34 : vector<128x1xf32>
    %36 = arith.addf %33, %35 : vector<128x1xf32>
    %c0_13 = arith.constant 0 : index
    %c2 = arith.constant 2 : index
    %37 = vector.load %arg1[%c0_13, %c2] : memref<128x16xf32, #tpu.memory_space<vmem>>, vector<128x1xf32>
    %38 = arith.mulf %37, %37 : vector<128x1xf32>
    %39 = arith.addf %36, %38 : vector<128x1xf32>
    %40 = math.sqrt %39 : vector<128x1xf32>
    %cst_14 = arith.constant 9.99999993E-9 : f32
    %41 = vector.broadcast %cst_14 : f32 to vector<128x1xf32>
    %42 = arith.maximumf %40, %41 : vector<128x1xf32>
    %cst_15 = arith.constant -1.000000e+00 : f32
    %43 = vector.broadcast %cst_15 : f32 to vector<128x1xf32>
    %44 = arith.divf %43, %42 : vector<128x1xf32>
    %cst_16 = arith.constant -5.000000e-01 : f32
    %45 = vector.broadcast %cst_16 : f32 to vector<128x1xf32>
    %46 = arith.mulf %45, %30 : vector<128x1xf32>
    %47 = arith.mulf %44, %28 : vector<128x1xf32>
    %48 = arith.addf %46, %47 : vector<128x1xf32>
    %cst_17 = arith.constant -5.000000e-01 : f32
    %49 = vector.broadcast %cst_17 : f32 to vector<128x1xf32>
    %50 = arith.mulf %49, %31 : vector<128x1xf32>
    %51 = arith.mulf %44, %29 : vector<128x1xf32>
    %52 = arith.addf %50, %51 : vector<128x1xf32>
    %53 = arith.mulf %28, %48 : vector<128x1xf32>
    %54 = arith.mulf %29, %52 : vector<128x1xf32>
    %55 = arith.addf %53, %54 : vector<128x1xf32>
    %56 = arith.mulf %28, %28 : vector<128x1xf32>
    %57 = arith.mulf %29, %29 : vector<128x1xf32>
    %58 = arith.addf %56, %57 : vector<128x1xf32>
    %59 = arith.mulf %48, %48 : vector<128x1xf32>
    %60 = arith.mulf %52, %52 : vector<128x1xf32>
    %61 = arith.addf %59, %60 : vector<128x1xf32>
    %c0_18 = arith.constant 0 : index
    %c8_19 = arith.constant 8 : index
    %62 = vector.load %arg1[%c0_18, %c8_19] : memref<128x16xf32, #tpu.memory_space<vmem>>, vector<128x1xf32>
    %c0_20 = arith.constant 0 : index
    %c9 = arith.constant 9 : index
    %63 = vector.load %arg1[%c0_20, %c9] : memref<128x16xf32, #tpu.memory_space<vmem>>, vector<128x1xf32>
    %64 = arith.subf %28, %62 : vector<128x1xf32>
    %65 = arith.mulf %64, %64 : vector<128x1xf32>
    %66 = arith.subf %29, %63 : vector<128x1xf32>
    %67 = arith.mulf %66, %66 : vector<128x1xf32>
    %68 = arith.addf %65, %67 : vector<128x1xf32>
    %c0_21 = arith.constant 0 : index
    %c10 = arith.constant 10 : index
    %69 = vector.load %arg1[%c0_21, %c10] : memref<128x16xf32, #tpu.memory_space<vmem>>, vector<128x1xf32>
    %cst_22 = arith.constant 9.99999996E-13 : f32
    %70 = vector.broadcast %cst_22 : f32 to vector<128x1xf32>
    %71 = arith.addf %69, %70 : vector<128x1xf32>
    %72 = arith.divf %58, %71 : vector<128x1xf32>
    %cst_23 = arith.constant 0.000000e+00 : f32
    %73 = vector.broadcast %cst_23 : f32 to vector<128x3xf32>
    %74 = tpu.concatenate %55, %58, %61, %68, %72, %73 in 1 : vector<128x1xf32>, vector<128x1xf32>, vector<128x1xf32>, vector<128x1xf32>, vector<128x1xf32>, vector<128x3xf32> -> vector<128x8xf32>
    %75 = tpu.iota {dimensions = array<i32: 0>} : vector<128x8xi32>
    %c128_i32 = arith.constant 128 : i32
    %76 = arith.muli %arg0, %c128_i32 : i32
    %77 = vector.broadcast %76 : i32 to vector<128x8xi32>
    %78 = arith.addi %75, %77 : vector<128x8xi32>
    %c200_i32 = arith.constant 200 : i32
    %79 = vector.broadcast %c200_i32 : i32 to vector<128x8xi32>
    %80 = arith.cmpi slt, %78, %79 : vector<128x8xi32>
    %cst_24 = arith.constant 0.000000e+00 : f32
    %81 = vector.broadcast %cst_24 : f32 to vector<128x8xf32>
    %82 = arith.select %80, %74, %81 : vector<128x8xi1>, vector<128x8xf32>
    %c0_25 = arith.constant 0 : index
    %c0_26 = arith.constant 0 : index
    %83 = vector.load %arg4[%c0_25, %c0_26] : memref<1x8xf32, #tpu.memory_space<vmem>>, vector<1x8xf32>
    %cst_27 = arith.constant dense<0.000000e+00> : vector<8xf32>
    %84 = vector.multi_reduction <add>, %82, %cst_27 [0] : vector<128x8xf32> to vector<8xf32>
    %85 = vector.shape_cast %84 : vector<8xf32> to vector<1x8xf32>
    %86 = arith.addf %83, %85 : vector<1x8xf32>
    %c0_28 = arith.constant 0 : index
    %c0_29 = arith.constant 0 : index
    %87 = vector.load %arg4[%c0_28, %c0_29] : memref<1x8xf32, #tpu.memory_space<vmem>>, vector<1x8xf32>
    tpu.vector_store %arg4[%c0_28, %c0_29], %86 {strides = array<i32>} : memref<1x8xf32, #tpu.memory_space<vmem>>, vector<1x8xf32>,
    %c1_i32 = arith.constant 1 : i32
    %88 = arith.cmpi eq, %arg0, %c1_i32 : i32
    %89 = arith.extui %88 : i1 to i32
    %c0_i32_30 = arith.constant 0 : i32
    %90 = arith.cmpi ne, %89, %c0_i32_30 : i32
    scf.if %90 {
      %c0_31 = arith.constant 0 : index
      %c0_32 = arith.constant 0 : index
      %91 = vector.load %arg4[%c0_31, %c0_32] : memref<1x8xf32, #tpu.memory_space<vmem>>, vector<1x8xf32>
      %92 = vector.extract_strided_slice %91 {offsets = [0, 0], sizes = [1, 1], strides = [1, 1]} : vector<1x8xf32> to vector<1x1xf32>
      %cst_33 = arith.constant 5.000000e-03 : f32
      %93 = vector.broadcast %cst_33 : f32 to vector<1x1xf32>
      %94 = arith.mulf %92, %93 : vector<1x1xf32>
      %95 = vector.extract_strided_slice %91 {offsets = [0, 1], sizes = [1, 1], strides = [1, 1]} : vector<1x8xf32> to vector<1x1xf32>
      %cst_34 = arith.constant 5.000000e-03 : f32
      %96 = vector.broadcast %cst_34 : f32 to vector<1x1xf32>
      %97 = arith.mulf %95, %96 : vector<1x1xf32>
      %98 = vector.extract_strided_slice %91 {offsets = [0, 2], sizes = [1, 1], strides = [1, 1]} : vector<1x8xf32> to vector<1x1xf32>
      %cst_35 = arith.constant 5.000000e-03 : f32
      %99 = vector.broadcast %cst_35 : f32 to vector<1x1xf32>
      %100 = arith.mulf %98, %99 : vector<1x1xf32>
      %cst_36 = arith.constant 9.99999996E-13 : f32
      %101 = vector.broadcast %cst_36 : f32 to vector<1x1xf32>
      %102 = arith.addf %97, %101 : vector<1x1xf32>
      %103 = arith.divf %94, %102 : vector<1x1xf32>
      %cst_37 = arith.constant 2.000000e+00 : f32
      %104 = vector.broadcast %cst_37 : f32 to vector<1x1xf32>
      %105 = arith.mulf %104, %103 : vector<1x1xf32>
      %106 = arith.mulf %105, %94 : vector<1x1xf32>
      %107 = arith.subf %100, %106 : vector<1x1xf32>
      %108 = arith.mulf %103, %103 : vector<1x1xf32>
      %109 = arith.mulf %108, %97 : vector<1x1xf32>
      %110 = arith.addf %107, %109 : vector<1x1xf32>
      %111 = vector.extract_strided_slice %91 {offsets = [0, 3], sizes = [1, 1], strides = [1, 1]} : vector<1x8xf32> to vector<1x1xf32>
      %cst_38 = arith.constant 5.000000e-03 : f32
      %112 = vector.broadcast %cst_38 : f32 to vector<1x1xf32>
      %113 = arith.mulf %111, %112 : vector<1x1xf32>
      %114 = vector.extract_strided_slice %91 {offsets = [0, 4], sizes = [1, 1], strides = [1, 1]} : vector<1x8xf32> to vector<1x1xf32>
      %cst_39 = arith.constant 5.000000e-03 : f32
      %115 = vector.broadcast %cst_39 : f32 to vector<1x1xf32>
      %116 = arith.mulf %114, %115 : vector<1x1xf32>
      %cst_40 = arith.constant 1.000000e+00 : f32
      %117 = vector.broadcast %cst_40 : f32 to vector<1x1xf32>
      %118 = arith.subf %116, %117 : vector<1x1xf32>
      %119 = arith.mulf %118, %118 : vector<1x1xf32>
      %cst_41 = arith.constant 1.000000e+00 : f32
      %120 = vector.broadcast %cst_41 : f32 to vector<1x1xf32>
      %121 = arith.mulf %120, %110 : vector<1x1xf32>
      %cst_42 = arith.constant 1.000000e+00 : f32
      %122 = vector.broadcast %cst_42 : f32 to vector<1x1xf32>
      %123 = arith.mulf %122, %113 : vector<1x1xf32>
      %124 = arith.addf %121, %123 : vector<1x1xf32>
      %cst_43 = arith.constant 1.000000e+00 : f32
      %125 = vector.broadcast %cst_43 : f32 to vector<1x1xf32>
      %126 = arith.mulf %125, %119 : vector<1x1xf32>
      %127 = arith.addf %124, %126 : vector<1x1xf32>
      %128 = tpu.iota {dimensions = array<i32: 1>} : vector<1x8xi32>
      %c0_i32_44 = arith.constant 0 : i32
      %129 = vector.broadcast %c0_i32_44 : i32 to vector<1x8xi32>
      %130 = arith.cmpi eq, %128, %129 : vector<1x8xi32>
      %cst_45 = arith.constant 0.000000e+00 : f32
      %131 = vector.shape_cast %127 : vector<1x1xf32> to vector<1x1xf32>
      %132 = vector.broadcast %131 : vector<1x1xf32> to vector<1x8xf32>
      %133 = vector.broadcast %cst_45 : f32 to vector<1x8xf32>
      %134 = arith.select %130, %132, %133 : vector<1x8xi1>, vector<1x8xf32>
      %c1_i32_46 = arith.constant 1 : i32
      %135 = vector.broadcast %c1_i32_46 : i32 to vector<1x8xi32>
      %136 = arith.cmpi eq, %128, %135 : vector<1x8xi32>
      %cst_47 = arith.constant 0.000000e+00 : f32
      %137 = vector.shape_cast %110 : vector<1x1xf32> to vector<1x1xf32>
      %138 = vector.broadcast %137 : vector<1x1xf32> to vector<1x8xf32>
      %139 = vector.broadcast %cst_47 : f32 to vector<1x8xf32>
      %140 = arith.select %136, %138, %139 : vector<1x8xi1>, vector<1x8xf32>
      %141 = arith.addf %134, %140 : vector<1x8xf32>
      %c2_i32 = arith.constant 2 : i32
      %142 = vector.broadcast %c2_i32 : i32 to vector<1x8xi32>
      %143 = arith.cmpi eq, %128, %142 : vector<1x8xi32>
      %cst_48 = arith.constant 0.000000e+00 : f32
      %144 = vector.shape_cast %113 : vector<1x1xf32> to vector<1x1xf32>
      %145 = vector.broadcast %144 : vector<1x1xf32> to vector<1x8xf32>
      %146 = vector.broadcast %cst_48 : f32 to vector<1x8xf32>
      %147 = arith.select %143, %145, %146 : vector<1x8xi1>, vector<1x8xf32>
      %148 = arith.addf %141, %147 : vector<1x8xf32>
      %c3_i32 = arith.constant 3 : i32
      %149 = vector.broadcast %c3_i32 : i32 to vector<1x8xi32>
      %150 = arith.cmpi eq, %128, %149 : vector<1x8xi32>
      %cst_49 = arith.constant 0.000000e+00 : f32
      %151 = vector.shape_cast %119 : vector<1x1xf32> to vector<1x1xf32>
      %152 = vector.broadcast %151 : vector<1x1xf32> to vector<1x8xf32>
      %153 = vector.broadcast %cst_49 : f32 to vector<1x8xf32>
      %154 = arith.select %150, %152, %153 : vector<1x8xi1>, vector<1x8xf32>
      %155 = arith.addf %148, %154 : vector<1x8xf32>
      %c4_i32 = arith.constant 4 : i32
      %156 = vector.broadcast %c4_i32 : i32 to vector<1x8xi32>
      %157 = arith.cmpi eq, %128, %156 : vector<1x8xi32>
      %cst_50 = arith.constant 0.000000e+00 : f32
      %158 = vector.shape_cast %103 : vector<1x1xf32> to vector<1x1xf32>
      %159 = vector.broadcast %158 : vector<1x1xf32> to vector<1x8xf32>
      %160 = vector.broadcast %cst_50 : f32 to vector<1x8xf32>
      %161 = arith.select %157, %159, %160 : vector<1x8xi1>, vector<1x8xf32>
      %162 = arith.addf %155, %161 : vector<1x8xf32>
      %c0_51 = arith.constant 0 : index
      %c0_52 = arith.constant 0 : index
      %163 = vector.load %arg3[%c0_51, %c0_52] : memref<1x8xf32, #tpu.memory_space<vmem>>, vector<1x8xf32>
      tpu.vector_store %arg3[%c0_51, %c0_52], %162 {strides = array<i32>} : memref<1x8xf32, #tpu.memory_space<vmem>>, vector<1x8xf32>,
    } else {
    }
    return
  }
  func.func @transform_0(%arg0: i32) -> (i32, i32) {
    %c0_i32 = arith.constant 0 : i32
    %c0_i32_0 = arith.constant 0 : i32
    return %arg0, %c0_i32 : i32, i32
  }
  func.func @transform_1(%arg0: i32) -> (i32, i32) {
    %c0_i32 = arith.constant 0 : i32
    %c0_i32_0 = arith.constant 0 : i32
    %c0_i32_1 = arith.constant 0 : i32
    return %c0_i32, %c0_i32_0 : i32, i32
  }
  func.func @transform_2(%arg0: i32) -> (i32, i32) {
    %c0_i32 = arith.constant 0 : i32
    %c0_i32_0 = arith.constant 0 : i32
    %c0_i32_1 = arith.constant 0 : i32
    return %c0_i32, %c0_i32_0 : i32, i32
  }
}

</mosaic_0001>

<llo_original>
// kernel: losses_forward.1
$region0: #{losses_forward.1}
  #allocation0 [shape = 'u32[]', space=smem, size = 0x4, offset = 0x4, fixed_abs, tag = 'smem constant byte address 0x4 - core index']
  #allocation1 [shape = 'u32[144,128]{1,0:T(1,128)}', space=vmem, size = 0x12000, scoped, tag = 'internal scratch']
  #allocation2 [shape = 'f32[1,8]{1,0:T(1,128)}', space=vmem, size = 0x200, scoped, tag = 'scratch operand']
  %s0 = inlined_call_operand.vmem [shape: f32[256,16], index: 0, kind: input, shape index: {}]
  %s1 = inlined_call_operand.vmem [shape: f32[48,32], index: 1, kind: input, shape index: {}]
  %s2 = inlined_call_operand.vmem [shape: f32[1,8], index: 2, kind: output, shape index: {}]
  %s3 = sld [smem:[#allocation0]]
  $region49: #{losses_forward.1} parent=0
    _
  %s5 = ssub.s32 1, %s3
  %s6 = scalar_select 0, %s5, %s3
  loop: start=0, step=1, limit=4
  $region2: #{losses_forward.1} parent=0 // loop_pre_header
    _
  $region3: #{losses_forward.1} parent=0 // loop_header
    %s8 = sphi 0, %s12
    %p9 = scmp.ge.s32.totalorder %s8, 4
    %s18 = sphi 0, %s20
    %s21 = sphi 0, %s18
    %s22 = sphi 0, %s21
    %s38 = sphi 0, %s22
    %s42 = sphi 0, %s42
    %s44 = sphi 0, %s42
    %s45 = sphi 0, %s44
    %s59 = sphi 0, %s45
    %s63 = sphi 0, %s63
    %s65 = sphi 0, %s63
    %s66 = sphi 0, %s65
    %s80 = sphi 0, %s66
  $region4: #{losses_forward.1} parent=0 // loop_header_branch
    %11 = sbr.rel (%p9) target = $region8
  $region5: #{losses_forward.1} parent=0 // loop_body
    %s13 = ssub.s32 %s8, 1
    %s14 = ssub.s32 %s8, 2
    %s15 = sadd.s32 %s8, 1
    %s16 = ssub.s32 %s8, %s15
    %p17 = scmp.eq.s32.totalorder %s16, 0
    %s19 = sadd.s32 %s18, 1
    %s20 = scalar_select %p17, %s18, %s19
    %p23 = pneg %p17
    %p24 = scmp.eq.s32.totalorder %s8, 1
    %p25 = por %p23, %p24
    %p26 = scmp.ne.s32.totalorder %s18, %s21
    %p27 = scmp.eq.s32.totalorder %s8, 0
    %p28 = por %p26, %p27
    %p29 = scmp.ne.s32.totalorder %s18, %s21
    %p30 = scmp.eq.s32.totalorder %s13, 1
    %p31 = por %p29, %p30
    %p32 = scmp.ne.s32.totalorder %s21, %s22
    %p33 = scmp.eq.s32.totalorder %s13, 0
    %p34 = por %p32, %p33
    %p35 = scmp.ne.s32.totalorder %s21, %s22
    %p36 = scmp.eq.s32.totalorder %s14, 1
    %p37 = por %p35, %p36
    %p39 = scmp.ne.s32.totalorder %s22, %s38
    %p40 = scmp.eq.s32.totalorder %s14, 0
    %p41 = por %p39, %p40
    %s43 = sadd.s32 %s42, 1
    %p46 = scmp.eq.s32.totalorder %s8, 1
    %p47 = scmp.ne.s32.totalorder %s42, %s44
    %p48 = scmp.eq.s32.totalorder %s8, 0
    %p49 = por %p47, %p48
    %p50 = scmp.ne.s32.totalorder %s42, %s44
    %p51 = scmp.eq.s32.totalorder %s13, 1
    %p52 = por %p50, %p51
    %p53 = scmp.ne.s32.totalorder %s44, %s45
    %p54 = scmp.eq.s32.totalorder %s13, 0
    %p55 = por %p53, %p54
    %p56 = scmp.ne.s32.totalorder %s44, %s45
    %p57 = scmp.eq.s32.totalorder %s14, 1
    %p58 = por %p56, %p57
    %p60 = scmp.ne.s32.totalorder %s45, %s59
    %p61 = scmp.eq.s32.totalorder %s14, 0
    %p62 = por %p60, %p61
    %s64 = sadd.s32 %s63, 1
    %p67 = scmp.eq.s32.totalorder %s8, 1
    %p68 = scmp.ne.s32.totalorder %s63, %s65
    %p69 = scmp.eq.s32.totalorder %s8, 0
    %p70 = por %p68, %p69
    %p71 = scmp.ne.s32.totalorder %s63, %s65
    %p72 = scmp.eq.s32.totalorder %s13, 1
    %p73 = por %p71, %p72
    %p74 = scmp.ne.s32.totalorder %s65, %s66
    %p75 = scmp.eq.s32.totalorder %s13, 0
    %p76 = por %p74, %p75
    %p77 = scmp.ne.s32.totalorder %s65, %s66
    %p78 = scmp.eq.s32.totalorder %s14, 1
    %p79 = por %p77, %p78
    %p81 = scmp.ne.s32.totalorder %s66, %s80
    %p82 = scmp.eq.s32.totalorder %s14, 0
    %p83 = por %p81, %p82
    %p84 = scmp.le.s32.totalorder 1, %s8
    %p85 = scmp.lt.s32.totalorder %s8, 3
    %p86 = pnand %p84, %p85
    %p87 = pneg %p86
    // Predicated region
    $region9: #{losses_forward.1} parent=5 // pred_check
      _
    $region10: #{losses_forward.1} parent=5 // pred_check_branch
      %89 = sbr.rel (%p86) target = $region12
    $region11: #{losses_forward.1} parent=5 // pred_region
      %s90 = ssub.s32 %s8, 1
      // Predicated region
      $region13: #{losses_forward.1} parent=11 // pred_check
        %p91 = pneg %p55
      $region14: #{losses_forward.1} parent=11 // pred_check_branch
        %93 = sbr.rel (%p91) target = $region16
      $region15: #{losses_forward.1} parent=11 // pred_region
        _
      $region16: #{losses_forward.1} parent=11 // pred_fallthru
        _
    $region12: #{losses_forward.1} parent=5 // pred_fallthru
      _
    %p94 = scmp.lt.s32.totalorder %s8, 2
    // Predicated region
    $region17: #{losses_forward.1} parent=5 // pred_check
      %p95 = pneg %p94
    $region18: #{losses_forward.1} parent=5 // pred_check_branch
      %97 = sbr.rel (%p95) target = $region20
    $region19: #{losses_forward.1} parent=5 // pred_region
      // Predicated region
      $region21: #{losses_forward.1} parent=19 // pred_check
        %p98 = pneg %p28
      $region22: #{losses_forward.1} parent=19 // pred_check_branch
        %100 = sbr.rel (%p98) target = $region24
      $region23: #{losses_forward.1} parent=19 // pred_region
        %s101 = smul.u32 16, %s8
        %p102 = scmp.lt.s32.totalorder %s101, 31
        %s103 = scalar_select %p102, %s101, 31
        %s104 = smul.addr %s103, 8
        %s105 = scalar_lea.vmem %s0, %s104
        %s106 = smul.u32 16, %s8
      $region24: #{losses_forward.1} parent=19 // pred_fallthru
        _
    $region20: #{losses_forward.1} parent=5 // pred_fallthru
      _
    %p107 = scmp.le.s32.totalorder 1, %s8
    %p108 = scmp.lt.s32.totalorder %s8, 3
    %p109 = pnand %p107, %p108
    %p110 = pneg %p109
    // Predicated region
    $region25: #{losses_forward.1} parent=5 // pred_check
      _
    $region26: #{losses_forward.1} parent=5 // pred_check_branch
      %112 = sbr.rel (%p109) target = $region28
    $region27: #{losses_forward.1} parent=5 // pred_region
      %s113 = ssub.s32 %s8, 1
      %s114 = smul.u32 16, %s13
      %p115 = scmp.lt.s32.totalorder %s114, 31
      %s116 = scalar_select %p115, %s114, 31
      %s117 = smul.addr %s116, 8
      %s118 = scalar_lea.vmem %s0, %s117
      %p119 = pneg %p34
      %p120 = pneg %p31
      %p121 = pneg %p55
      %p122 = pneg %p52
      %p123 = pneg %p76
      %p124 = pneg %p73
      %s125 = smul.u32 16, %s13
      %p126 = scmp.lt.s32.totalorder %s125, 31
      %s127 = scalar_select %p126, %s125, 31
      %s128 = smul.addr %s127, 8
      %s129 = scalar_lea.vmem %s0, %s128
      %s130 = smul.u32 16, %s13
      %p131 = scmp.eq.s32.totalorder %s13, 0
      // Predicated region
      $region29: #{losses_forward.1} parent=27 // pred_check
        %p132 = pneg %p131
      $region30: #{losses_forward.1} parent=27 // pred_check_branch
        %134 = sbr.rel (%p132) target = $region32
      $region31: #{losses_forward.1} parent=27 // pred_region
        %vm135 = vcmask 57344
        %136 = vst.msk [vmem:[#allocation2] sm:$0x1] %vm135, 0.0
      $region32: #{losses_forward.1} parent=27 // pred_fallthru
        _
      %v137 = vld [vmem:[%s1] sm:$0xff]
      %v138 = vld [vmem:[%s1 + $0x8] sm:$0x1]
      %v139 = vld [vmem:[%s1 + $0x10] sm:$0xff]
      %v140 = vld [vmem:[%s1 + $0x18] sm:$0xff]
      %v141 = vld [vmem:[%s1 + $0x20] sm:$0xff]
      %v142 = vld [vmem:[%s1 + $0x28] sm:$0xff]
      %v143 = vld [vmem:[%s129] sm:$0xff]
      %v144 = vld [vmem:[%s129 + $0x8] sm:$0xff]
      %v145 = vld [vmem:[%s129 + $0x10] sm:$0xff]
      %v146 = vld [vmem:[%s129 + $0x18] sm:$0xff]
      %v147 = vld [vmem:[%s129 + $0x20] sm:$0xff]
      %v148 = vld [vmem:[%s129 + $0x28] sm:$0xff]
      %v149 = vld [vmem:[%s129 + $0x30] sm:$0xff]
      %v150 = vld [vmem:[%s129 + $0x38] sm:$0xff]
      %v151 = vld [vmem:[%s129 + $0x40] sm:$0xff]
      %v152 = vld [vmem:[%s129 + $0x48] sm:$0xff]
      %v153 = vld [vmem:[%s129 + $0x50] sm:$0xff]
      %v154 = vld [vmem:[%s129 + $0x58] sm:$0xff]
      %v155 = vld [vmem:[%s129 + $0x60] sm:$0xff]
      %v156 = vld [vmem:[%s129 + $0x68] sm:$0xff]
      %v157 = vld [vmem:[%s129 + $0x70] sm:$0xff]
      %v158 = vld [vmem:[%s129 + $0x78] sm:$0xff]
      %vm159 = vcmask 64512
      %v161 = vsel %vm159, %v143, 0
      %v164 = vsel %vm159, %v144, 0
      %v167 = vsel %vm159, %v145, 0
      %v170 = vsel %vm159, %v146, 0
      %v173 = vsel %vm159, %v147, 0
      %v176 = vsel %vm159, %v148, 0
      %v179 = vsel %vm159, %v149, 0
      %v182 = vsel %vm159, %v150, 0
      %v185 = vsel %vm159, %v151, 0
      %v188 = vsel %vm159, %v152, 0
      %v191 = vsel %vm159, %v153, 0
      %v194 = vsel %vm159, %v154, 0
      %v197 = vsel %vm159, %v155, 0
      %v200 = vsel %vm159, %v156, 0
      %v203 = vsel %vm159, %v157, 0
      %v206 = vsel %vm159, %v158, 0
      %208 = vmatprep.subr.mxu0 0.0
      %209 = vmatpush1.msra.mxu0 0.0
      %210 = vmatprep.subr.mxu0 0.0
      %211 = vmatpush1.msra.mxu0 0.0
      %212 = vmatprep.subr.mxu0 0.0
      %213 = vmatpush1.msra.mxu0 0.0
      %214 = vmatprep.subr.mxu0 0.0
      %215 = vmatpush1.msra.mxu0 0.0
      %216 = vmatprep.subr.mxu0 0.0
      %217 = vmatpush1.msra.mxu0 0.0
      %218 = vmatprep.subr.mxu0 0.0
      %219 = vmatpush1.msra.mxu0 0.0
      %220 = vmatprep.subr.mxu0 0.0
      %221 = vmatpush1.msra.mxu0 0.0
      %222 = vmatprep.subr.mxu0 0.0
      %223 = vmatpush1.msra.mxu0 0.0
      %224 = vmatprep.subr.mxu0 0.0
      %225 = vmatpush1.msra.mxu0 0.0
      %226 = vmatprep.subr.mxu0 0.0
      %227 = vmatpush1.msra.mxu0 0.0
      %228 = vmatprep.subr.mxu0 0.0
      %229 = vmatpush1.msra.mxu0 0.0
      %230 = vmatprep.subr.mxu0 0.0
      %231 = vmatpush1.msra.mxu0 0.0
      %232 = vmatprep.subr.mxu0 0.0
      %233 = vmatpush1.msra.mxu0 0.0
      %234 = vmatprep.subr.mxu0 0.0
      %235 = vmatpush1.msra.mxu0 0.0
      %236 = vmatprep.subr.mxu0 0.0
      %237 = vmatpush1.msra.mxu0 0.0
      %238 = vmatprep.subr.mxu0 0.0
      %239 = vmatpush1.msra.mxu0 %v137
      %240 = vmatprep.subr.mxu0 0.0
      %241 = vmatpush2.msra.mxu0 0.0
      %242 = vmatprep.subr.mxu0 0.0
      %243 = vmatpush2.msra.mxu0 0.0
      %244 = vmatprep.subr.mxu0 0.0
      %245 = vmatpush2.msra.mxu0 0.0
      %246 = vmatprep.subr.mxu0 0.0
      %247 = vmatpush2.msra.mxu0 0.0
      %248 = vmatprep.subr.mxu0 0.0
      %249 = vmatpush2.msra.mxu0 0.0
      %250 = vmatprep.subr.mxu0 0.0
      %251 = vmatpush2.msra.mxu0 0.0
      %252 = vmatprep.subr.mxu0 0.0
      %253 = vmatpush2.msra.mxu0 0.0
      %254 = vmatprep.subr.mxu0 0.0
      %255 = vmatpush2.msra.mxu0 0.0
      %256 = vmatprep.subr.mxu0 0.0
      %257 = vmatpush2.msra.mxu0 0.0
      %258 = vmatprep.subr.mxu0 0.0
      %259 = vmatpush2.msra.mxu0 0.0
      %260 = vmatprep.subr.mxu0 0.0
      %261 = vmatpush2.msra.mxu0 0.0
      %262 = vmatprep.subr.mxu0 0.0
      %263 = vmatpush2.msra.mxu0 0.0
      %264 = vmatprep.subr.mxu0 0.0
      %265 = vmatpush2.msra.mxu0 0.0
      %266 = vmatprep.subr.mxu0 0.0
      %267 = vmatpush2.msra.mxu0 0.0
      %268 = vmatprep.subr.mxu0 0.0
      %269 = vmatpush2.msra.mxu0 0.0
      %270 = vmatprep.subr.mxu0 0.0
      %271 = vmatpush2.msra.mxu0 0.0
      %272 = vmatprep.mubr.f32.mxu0 0.0
      %273 = vmatmul.mubr.f32.gmra.mxu0 %v161
      %v274 = vpop.f32.mrf.mxu0
      %v275 = vadd.f32 0.0, %v274
      %v276 = vpop.f32.mrf.mxu0
      %277 = vmatprep.mubr.f32.mxu0 0.0
      %278 = vmatmul.mubr.f32.gmra.mxu0 %v164
      %v279 = vpop.f32.mrf.mxu0
      %v280 = vadd.f32 0.0, %v279
      %v281 = vpop.f32.mrf.mxu0
      %282 = vmatprep.mubr.f32.mxu0 0.0
      %283 = vmatmul.mubr.f32.gmra.mxu0 %v167
      %v284 = vpop.f32.mrf.mxu0
      %v285 = vadd.f32 0.0, %v284
      %v286 = vpop.f32.mrf.mxu0
      %287 = vmatprep.mubr.f32.mxu0 0.0
      %288 = vmatmul.mubr.f32.gmra.mxu0 %v170
      %v289 = vpop.f32.mrf.mxu0
      %v290 = vadd.f32 0.0, %v289
      %v291 = vpop.f32.mrf.mxu0
      %292 = vmatprep.mubr.f32.mxu0 0.0
      %293 = vmatmul.mubr.f32.gmra.mxu0 %v173
      %v294 = vpop.f32.mrf.mxu0
      %v295 = vadd.f32 0.0, %v294
      %v296 = vpop.f32.mrf.mxu0
      %297 = vmatprep.mubr.f32.mxu0 0.0
      %298 = vmatmul.mubr.f32.gmra.mxu0 %v176
      %v299 = vpop.f32.mrf.mxu0
      %v300 = vadd.f32 0.0, %v299
      %v301 = vpop.f32.mrf.mxu0
      %302 = vmatprep.mubr.f32.mxu0 0.0
      %303 = vmatmul.mubr.f32.gmra.mxu0 %v179
      %v304 = vpop.f32.mrf.mxu0
      %v305 = vadd.f32 0.0, %v304
      %v306 = vpop.f32.mrf.mxu0
      %307 = vmatprep.mubr.f32.mxu0 0.0
      %308 = vmatmul.mubr.f32.gmra.mxu0 %v182
      %v309 = vpop.f32.mrf.mxu0
      %v310 = vadd.f32 0.0, %v309
      %v311 = vpop.f32.mrf.mxu0
      %312 = vmatprep.mubr.f32.mxu0 0.0
      %313 = vmatmul.mubr.f32.gmra.mxu0 %v185
      %v314 = vpop.f32.mrf.mxu0
      %v315 = vadd.f32 0.0, %v314
      %v316 = vpop.f32.mrf.mxu0
      %317 = vmatprep.mubr.f32.mxu0 0.0
      %318 = vmatmul.mubr.f32.gmra.mxu0 %v188
      %v319 = vpop.f32.mrf.mxu0
      %v320 = vadd.f32 0.0, %v319
      %v321 = vpop.f32.mrf.mxu0
      %322 = vmatprep.mubr.f32.mxu0 0.0
      %323 = vmatmul.mubr.f32.gmra.mxu0 %v191
      %v324 = vpop.f32.mrf.mxu0
      %v325 = vadd.f32 0.0, %v324
      %v326 = vpop.f32.mrf.mxu0
      %327 = vmatprep.mubr.f32.mxu0 0.0
      %328 = vmatmul.mubr.f32.gmra.mxu0 %v194
      %v329 = vpop.f32.mrf.mxu0
      %v330 = vadd.f32 0.0, %v329
      %v331 = vpop.f32.mrf.mxu0
      %332 = vmatprep.mubr.f32.mxu0 0.0
      %333 = vmatmul.mubr.f32.gmra.mxu0 %v197
      %v334 = vpop.f32.mrf.mxu0
      %v335 = vadd.f32 0.0, %v334
      %v336 = vpop.f32.mrf.mxu0
      %337 = vmatprep.mubr.f32.mxu0 0.0
      %338 = vmatmul.mubr.f32.gmra.mxu0 %v200
      %v339 = vpop.f32.mrf.mxu0
      %v340 = vadd.f32 0.0, %v339
      %v341 = vpop.f32.mrf.mxu0
      %342 = vmatprep.mubr.f32.mxu0 0.0
      %343 = vmatmul.mubr.f32.gmra.mxu0 %v203
      %v344 = vpop.f32.mrf.mxu0
      %v345 = vadd.f32 0.0, %v344
      %v346 = vpop.f32.mrf.mxu0
      %347 = vmatprep.mubr.f32.mxu0 0.0
      %348 = vmatmul.mubr.f32.gmra.mxu0 %v206
      %v349 = vpop.f32.mrf.mxu0
      %v350 = vadd.f32 0.0, %v349
      %v351 = vpop.f32.mrf.mxu0
      %352 = vdwg.mxu0
      %v353 = vtanh.pop %v275
      %v354 = vtanh.pop %v280
      %v355 = vtanh.pop %v285
      %v356 = vtanh.pop %v290
      %v357 = vtanh.pop %v295
      %v358 = vtanh.pop %v300
      %v359 = vtanh.pop %v305
      %v360 = vtanh.pop %v310
      %v361 = vtanh.pop %v315
      %v362 = vtanh.pop %v320
      %v363 = vtanh.pop %v325
      %v364 = vtanh.pop %v330
      %v365 = vtanh.pop %v335
      %v366 = vtanh.pop %v340
      %v367 = vtanh.pop %v345
      %v368 = vtanh.pop %v350
      %v369 = vmul.f32 %v137, %v137
      %vm370 = vcmask 256000
      %v371 = vsel %vm370, %v369, 0.0
      %v372 = vrot.slane %v371, 4
      %v373 = vadd.f32 %v371, %v372
      %v374 = vrot.slane %v373, 2
      %v375 = vadd.f32 %v373, %v374
      %v376 = vrot.slane %v375, 1
      %v377 = vadd.f32 %v375, %v376
      %v378 = vmul.f32 %v353, -2.0
      %v379 = vmul.f32 %v354, -2.0
      %v380 = vmul.f32 %v355, -2.0
      %v381 = vmul.f32 %v356, -2.0
      %v382 = vmul.f32 %v357, -2.0
      %v383 = vmul.f32 %v358, -2.0
      %v384 = vmul.f32 %v359, -2.0
      %v385 = vmul.f32 %v360, -2.0
      %v386 = vmul.f32 %v361, -2.0
      %v387 = vmul.f32 %v362, -2.0
      %v388 = vmul.f32 %v363, -2.0
      %v389 = vmul.f32 %v364, -2.0
      %v390 = vmul.f32 %v365, -2.0
      %v391 = vmul.f32 %v366, -2.0
      %v392 = vmul.f32 %v367, -2.0
      %v393 = vmul.f32 %v368, -2.0
      %v394 = vmul.f32 %v353, %v353
      %v395 = vmul.f32 %v354, %v354
      %v396 = vmul.f32 %v355, %v355
      %v397 = vmul.f32 %v356, %v356
      %v398 = vmul.f32 %v357, %v357
      %v399 = vmul.f32 %v358, %v358
      %v400 = vmul.f32 %v359, %v359
      %v401 = vmul.f32 %v360, %v360
      %v402 = vmul.f32 %v361, %v361
      %v403 = vmul.f32 %v362, %v362
      %v404 = vmul.f32 %v363, %v363
      %v405 = vmul.f32 %v364, %v364
      %v406 = vmul.f32 %v365, %v365
      %v407 = vmul.f32 %v366, %v366
      %v408 = vmul.f32 %v367, %v367
      %v409 = vmul.f32 %v368, %v368
      %v410 = vsub.f32 1.0, %v394
      %v411 = vsub.f32 1.0, %v395
      %v412 = vsub.f32 1.0, %v396
      %v413 = vsub.f32 1.0, %v397
      %v414 = vsub.f32 1.0, %v398
      %v415 = vsub.f32 1.0, %v399
      %v416 = vsub.f32 1.0, %v400
      %v417 = vsub.f32 1.0, %v401
      %v418 = vsub.f32 1.0, %v402
      %v419 = vsub.f32 1.0, %v403
      %v420 = vsub.f32 1.0, %v404
      %v421 = vsub.f32 1.0, %v405
      %v422 = vsub.f32 1.0, %v406
      %v423 = vsub.f32 1.0, %v407
      %v424 = vsub.f32 1.0, %v408
      %v425 = vsub.f32 1.0, %v409
      %v426 = vmul.f32 %v378, %v410
      %v427 = vmul.f32 %v379, %v411
      %v428 = vmul.f32 %v380, %v412
      %v429 = vmul.f32 %v381, %v413
      %v430 = vmul.f32 %v382, %v414
      %v431 = vmul.f32 %v383, %v415
      %v432 = vmul.f32 %v384, %v416
      %v433 = vmul.f32 %v385, %v417
      %v434 = vmul.f32 %v386, %v418
      %v435 = vmul.f32 %v387, %v419
      %v436 = vmul.f32 %v388, %v420
      %v437 = vmul.f32 %v389, %v421
      %v438 = vmul.f32 %v390, %v422
      %v439 = vmul.f32 %v391, %v423
      %v440 = vmul.f32 %v392, %v424
      %v441 = vmul.f32 %v393, %v425
      %v442 = vmul.f32 %v426, %v377
      %v443 = vmul.f32 %v427, %v377
      %v444 = vmul.f32 %v428, %v377
      %v445 = vmul.f32 %v429, %v377
      %v446 = vmul.f32 %v430, %v377
      %v447 = vmul.f32 %v431, %v377
      %v448 = vmul.f32 %v432, %v377
      %v449 = vmul.f32 %v433, %v377
      %v450 = vmul.f32 %v434, %v377
      %v451 = vmul.f32 %v435, %v377
      %v452 = vmul.f32 %v436, %v377
      %v453 = vmul.f32 %v437, %v377
      %v454 = vmul.f32 %v438, %v377
      %v455 = vmul.f32 %v439, %v377
      %v456 = vmul.f32 %v440, %v377
      %v457 = vmul.f32 %v441, %v377
      %vm458 = vcmask 261120
      %v460 = vsel %vm458, %v353, 0
      %v463 = vsel %vm458, %v354, 0
      %v466 = vsel %vm458, %v355, 0
      %v469 = vsel %vm458, %v356, 0
      %v472 = vsel %vm458, %v357, 0
      %v475 = vsel %vm458, %v358, 0
      %v478 = vsel %vm458, %v359, 0
      %v481 = vsel %vm458, %v360, 0
      %v484 = vsel %vm458, %v361, 0
      %v487 = vsel %vm458, %v362, 0
      %v490 = vsel %vm458, %v363, 0
      %v493 = vsel %vm458, %v364, 0
      %v496 = vsel %vm458, %v365, 0
      %v499 = vsel %vm458, %v366, 0
      %v502 = vsel %vm458, %v367, 0
      %v505 = vsel %vm458, %v368, 0
      %v508 = vsel %vm458, %v442, 0
      %v511 = vsel %vm458, %v443, 0
      %v514 = vsel %vm458, %v444, 0
      %v517 = vsel %vm458, %v445, 0
      %v520 = vsel %vm458, %v446, 0
      %v523 = vsel %vm458, %v447, 0
      %v526 = vsel %vm458, %v448, 0
      %v529 = vsel %vm458, %v449, 0
      %v532 = vsel %vm458, %v450, 0
      %v535 = vsel %vm458, %v451, 0
      %v538 = vsel %vm458, %v452, 0
      %v541 = vsel %vm458, %v453, 0
      %v544 = vsel %vm458, %v454, 0
      %v547 = vsel %vm458, %v455, 0
      %v550 = vsel %vm458, %v456, 0
      %v553 = vsel %vm458, %v457, 0
      %555 = vmatprep.subr.mxu0 0.0
      %556 = vmatpush1.msra.mxu0 0.0
      %557 = vmatprep.subr.mxu0 0.0
      %558 = vmatpush1.msra.mxu0 0.0
      %559 = vmatprep.subr.mxu0 0.0
      %560 = vmatpush1.msra.mxu0 0.0
      %561 = vmatprep.subr.mxu0 0.0
      %562 = vmatpush1.msra.mxu0 0.0
      %563 = vmatprep.subr.mxu0 0.0
      %564 = vmatpush1.msra.mxu0 0.0
      %565 = vmatprep.subr.mxu0 0.0
      %566 = vmatpush1.msra.mxu0 0.0
      %567 = vmatprep.subr.mxu0 0.0
      %568 = vmatpush1.msra.mxu0 0.0
      %569 = vmatprep.subr.mxu0 0.0
      %570 = vmatpush1.msra.mxu0 0.0
      %571 = vmatprep.subr.mxu0 0.0
      %572 = vmatpush1.msra.mxu0 0.0
      %573 = vmatprep.subr.mxu0 0.0
      %574 = vmatpush1.msra.mxu0 0.0
      %575 = vmatprep.subr.mxu0 0.0
      %576 = vmatpush1.msra.mxu0 0.0
      %577 = vmatprep.subr.mxu0 0.0
      %578 = vmatpush1.msra.mxu0 0.0
      %579 = vmatprep.subr.mxu0 0.0
      %580 = vmatpush1.msra.mxu0 %v142
      %581 = vmatprep.subr.mxu0 0.0
      %582 = vmatpush1.msra.mxu0 %v141
      %583 = vmatprep.subr.mxu0 0.0
      %584 = vmatpush1.msra.mxu0 %v140
      %585 = vmatprep.subr.mxu0 0.0
      %586 = vmatpush1.msra.mxu0 %v139
      %587 = vmatprep.subr.mxu0 0.0
      %588 = vmatpush2.msra.mxu0 0.0
      %589 = vmatprep.subr.mxu0 0.0
      %590 = vmatpush2.msra.mxu0 0.0
      %591 = vmatprep.subr.mxu0 0.0
      %592 = vmatpush2.msra.mxu0 0.0
      %593 = vmatprep.subr.mxu0 0.0
      %594 = vmatpush2.msra.mxu0 0.0
      %595 = vmatprep.subr.mxu0 0.0
      %596 = vmatpush2.msra.mxu0 0.0
      %597 = vmatprep.subr.mxu0 0.0
      %598 = vmatpush2.msra.mxu0 0.0
      %599 = vmatprep.subr.mxu0 0.0
      %600 = vmatpush2.msra.mxu0 0.0
      %601 = vmatprep.subr.mxu0 0.0
      %602 = vmatpush2.msra.mxu0 0.0
      %603 = vmatprep.subr.mxu0 0.0
      %604 = vmatpush2.msra.mxu0 0.0
      %605 = vmatprep.subr.mxu0 0.0
      %606 = vmatpush2.msra.mxu0 0.0
      %607 = vmatprep.subr.mxu0 0.0
      %608 = vmatpush2.msra.mxu0 0.0
      %609 = vmatprep.subr.mxu0 0.0
      %610 = vmatpush2.msra.mxu0 0.0
      %611 = vmatprep.subr.mxu0 0.0
      %612 = vmatpush2.msra.mxu0 0.0
      %613 = vmatprep.subr.mxu0 0.0
      %614 = vmatpush2.msra.mxu0 0.0
      %615 = vmatprep.subr.mxu0 0.0
      %616 = vmatpush2.msra.mxu0 0.0
      %617 = vmatprep.subr.mxu0 0.0
      %618 = vmatpush2.msra.mxu0 0.0
      %619 = vmatprep.mubr.f32.mxu0 0.0
      %620 = vmatmul.mubr.f32.gmra.mxu0 %v460
      %v621 = vpop.f32.mrf.mxu0
      %v622 = vadd.f32 0.0, %v621
      %v623 = vpop.f32.mrf.mxu0
      %624 = vmatprep.mubr.f32.mxu0 0.0
      %625 = vmatmul.mubr.f32.gmra.mxu0 %v463
      %v626 = vpop.f32.mrf.mxu0
      %v627 = vadd.f32 0.0, %v626
      %v628 = vpop.f32.mrf.mxu0
      %629 = vmatprep.mubr.f32.mxu0 0.0
      %630 = vmatmul.mubr.f32.gmra.mxu0 %v466
      %v631 = vpop.f32.mrf.mxu0
      %v632 = vadd.f32 0.0, %v631
      %v633 = vpop.f32.mrf.mxu0
      %634 = vmatprep.mubr.f32.mxu0 0.0
      %635 = vmatmul.mubr.f32.gmra.mxu0 %v469
      %v636 = vpop.f32.mrf.mxu0
      %v637 = vadd.f32 0.0, %v636
      %v638 = vpop.f32.mrf.mxu0
      %639 = vmatprep.mubr.f32.mxu0 0.0
      %640 = vmatmul.mubr.f32.gmra.mxu0 %v472
      %v641 = vpop.f32.mrf.mxu0
      %v642 = vadd.f32 0.0, %v641
      %v643 = vpop.f32.mrf.mxu0
      %644 = vmatprep.mubr.f32.mxu0 0.0
      %645 = vmatmul.mubr.f32.gmra.mxu0 %v475
      %v646 = vpop.f32.mrf.mxu0
      %v647 = vadd.f32 0.0, %v646
      %v648 = vpop.f32.mrf.mxu0
      %649 = vmatprep.mubr.f32.mxu0 0.0
      %650 = vmatmul.mubr.f32.gmra.mxu0 %v478
      %v651 = vpop.f32.mrf.mxu0
      %v652 = vadd.f32 0.0, %v651
      %v653 = vpop.f32.mrf.mxu0
      %654 = vmatprep.mubr.f32.mxu0 0.0
      %655 = vmatmul.mubr.f32.gmra.mxu0 %v481
      %v656 = vpop.f32.mrf.mxu0
      %v657 = vadd.f32 0.0, %v656
      %v658 = vpop.f32.mrf.mxu0
      %659 = vmatprep.mubr.f32.mxu0 0.0
      %660 = vmatmul.mubr.f32.gmra.mxu0 %v484
      %v661 = vpop.f32.mrf.mxu0
      %v662 = vadd.f32 0.0, %v661
      %v663 = vpop.f32.mrf.mxu0
      %664 = vmatprep.mubr.f32.mxu0 0.0
      %665 = vmatmul.mubr.f32.gmra.mxu0 %v487
      %v666 = vpop.f32.mrf.mxu0
      %v667 = vadd.f32 0.0, %v666
      %v668 = vpop.f32.mrf.mxu0
      %669 = vmatprep.mubr.f32.mxu0 0.0
      %670 = vmatmul.mubr.f32.gmra.mxu0 %v490
      %v671 = vpop.f32.mrf.mxu0
      %v672 = vadd.f32 0.0, %v671
      %v673 = vpop.f32.mrf.mxu0
      %674 = vmatprep.mubr.f32.mxu0 0.0
      %675 = vmatmul.mubr.f32.gmra.mxu0 %v493
      %v676 = vpop.f32.mrf.mxu0
      %v677 = vadd.f32 0.0, %v676
      %v678 = vpop.f32.mrf.mxu0
      %679 = vmatprep.mubr.f32.mxu0 0.0
      %680 = vmatmul.mubr.f32.gmra.mxu0 %v496
      %v681 = vpop.f32.mrf.mxu0
      %v682 = vadd.f32 0.0, %v681
      %v683 = vpop.f32.mrf.mxu0
      %684 = vmatprep.mubr.f32.mxu0 0.0
      %685 = vmatmul.mubr.f32.gmra.mxu0 %v499
      %v686 = vpop.f32.mrf.mxu0
      %v687 = vadd.f32 0.0, %v686
      %v688 = vpop.f32.mrf.mxu0
      %689 = vmatprep.mubr.f32.mxu0 0.0
      %690 = vmatmul.mubr.f32.gmra.mxu0 %v502
      %v691 = vpop.f32.mrf.mxu0
      %v692 = vadd.f32 0.0, %v691
      %v693 = vpop.f32.mrf.mxu0
      %694 = vmatprep.mubr.f32.mxu0 0.0
      %695 = vmatmul.mubr.f32.gmra.mxu0 %v505
      %v696 = vpop.f32.mrf.mxu0
      %v697 = vadd.f32 0.0, %v696
      %v698 = vpop.f32.mrf.mxu0
      %699 = vmatprep.mubr.f32.mxu0 0.0
      %700 = vmatmul.mubr.f32.gmra.mxu0 %v508
      %v701 = vpop.f32.mrf.mxu0
      %v702 = vadd.f32 0.0, %v701
      %v703 = vpop.f32.mrf.mxu0
      %704 = vmatprep.mubr.f32.mxu0 0.0
      %705 = vmatmul.mubr.f32.gmra.mxu0 %v511
      %v706 = vpop.f32.mrf.mxu0
      %v707 = vadd.f32 0.0, %v706
      %v708 = vpop.f32.mrf.mxu0
      %709 = vmatprep.mubr.f32.mxu0 0.0
      %710 = vmatmul.mubr.f32.gmra.mxu0 %v514
      %v711 = vpop.f32.mrf.mxu0
      %v712 = vadd.f32 0.0, %v711
      %v713 = vpop.f32.mrf.mxu0
      %714 = vmatprep.mubr.f32.mxu0 0.0
      %715 = vmatmul.mubr.f32.gmra.mxu0 %v517
      %v716 = vpop.f32.mrf.mxu0
      %v717 = vadd.f32 0.0, %v716
      %v718 = vpop.f32.mrf.mxu0
      %719 = vmatprep.mubr.f32.mxu0 0.0
      %720 = vmatmul.mubr.f32.gmra.mxu0 %v520
      %v721 = vpop.f32.mrf.mxu0
      %v722 = vadd.f32 0.0, %v721
      %v723 = vpop.f32.mrf.mxu0
      %724 = vmatprep.mubr.f32.mxu0 0.0
      %725 = vmatmul.mubr.f32.gmra.mxu0 %v523
      %v726 = vpop.f32.mrf.mxu0
      %v727 = vadd.f32 0.0, %v726
      %v728 = vpop.f32.mrf.mxu0
      %729 = vmatprep.mubr.f32.mxu0 0.0
      %730 = vmatmul.mubr.f32.gmra.mxu0 %v526
      %v731 = vpop.f32.mrf.mxu0
      %v732 = vadd.f32 0.0, %v731
      %v733 = vpop.f32.mrf.mxu0
      %734 = vmatprep.mubr.f32.mxu0 0.0
      %735 = vmatmul.mubr.f32.gmra.mxu0 %v529
      %v736 = vpop.f32.mrf.mxu0
      %v737 = vadd.f32 0.0, %v736
      %v738 = vpop.f32.mrf.mxu0
      %739 = vmatprep.mubr.f32.mxu0 0.0
      %740 = vmatmul.mubr.f32.gmra.mxu0 %v532
      %v741 = vpop.f32.mrf.mxu0
      %v742 = vadd.f32 0.0, %v741
      %v743 = vpop.f32.mrf.mxu0
      %744 = vmatprep.mubr.f32.mxu0 0.0
      %745 = vmatmul.mubr.f32.gmra.mxu0 %v535
      %v746 = vpop.f32.mrf.mxu0
      %v747 = vadd.f32 0.0, %v746
      %v748 = vpop.f32.mrf.mxu0
      %749 = vmatprep.mubr.f32.mxu0 0.0
      %750 = vmatmul.mubr.f32.gmra.mxu0 %v538
      %v751 = vpop.f32.mrf.mxu0
      %v752 = vadd.f32 0.0, %v751
      %v753 = vpop.f32.mrf.mxu0
      %754 = vmatprep.mubr.f32.mxu0 0.0
      %755 = vmatmul.mubr.f32.gmra.mxu0 %v541
      %v756 = vpop.f32.mrf.mxu0
      %v757 = vadd.f32 0.0, %v756
      %v758 = vpop.f32.mrf.mxu0
      %759 = vmatprep.mubr.f32.mxu0 0.0
      %760 = vmatmul.mubr.f32.gmra.mxu0 %v544
      %v761 = vpop.f32.mrf.mxu0
      %v762 = vadd.f32 0.0, %v761
      %v763 = vpop.f32.mrf.mxu0
      %764 = vmatprep.mubr.f32.mxu0 0.0
      %765 = vmatmul.mubr.f32.gmra.mxu0 %v547
      %v766 = vpop.f32.mrf.mxu0
      %v767 = vadd.f32 0.0, %v766
      %v768 = vpop.f32.mrf.mxu0
      %769 = vmatprep.mubr.f32.mxu0 0.0
      %770 = vmatmul.mubr.f32.gmra.mxu0 %v550
      %v771 = vpop.f32.mrf.mxu0
      %v772 = vadd.f32 0.0, %v771
      %v773 = vpop.f32.mrf.mxu0
      %774 = vmatprep.mubr.f32.mxu0 0.0
      %775 = vmatmul.mubr.f32.gmra.mxu0 %v553
      %v776 = vpop.f32.mrf.mxu0
      %v777 = vadd.f32 0.0, %v776
      %v778 = vpop.f32.mrf.mxu0
      %779 = vdwg.mxu0
      %v780 = vlaneseq
      %v781 = vshrl.u32 %v780, 7
      %v782 = vsub.s32 0, %v781
      %v783 = vrot.slane %v138, %v782
      %v784 = vadd.f32 %v622, %v783
      %v785 = vadd.f32 %v627, %v783
      %v786 = vadd.f32 %v632, %v783
      %v787 = vadd.f32 %v637, %v783
      %v788 = vadd.f32 %v642, %v783
      %v789 = vadd.f32 %v647, %v783
      %v790 = vadd.f32 %v652, %v783
      %v791 = vadd.f32 %v657, %v783
      %v792 = vadd.f32 %v662, %v783
      %v793 = vadd.f32 %v667, %v783
      %v794 = vadd.f32 %v672, %v783
      %v795 = vadd.f32 %v677, %v783
      %v796 = vadd.f32 %v682, %v783
      %v797 = vadd.f32 %v687, %v783
      %v798 = vadd.f32 %v692, %v783
      %v799 = vadd.f32 %v697, %v783
      %v800 = vmul.f32 %v143, %v143
      %v801 = vmul.f32 %v144, %v144
      %v802 = vmul.f32 %v145, %v145
      %v803 = vmul.f32 %v146, %v146
      %v804 = vmul.f32 %v147, %v147
      %v805 = vmul.f32 %v148, %v148
      %v806 = vmul.f32 %v149, %v149
      %v807 = vmul.f32 %v150, %v150
      %v808 = vmul.f32 %v151, %v151
      %v809 = vmul.f32 %v152, %v152
      %v810 = vmul.f32 %v153, %v153
      %v811 = vmul.f32 %v154, %v154
      %v812 = vmul.f32 %v155, %v155
      %v813 = vmul.f32 %v156, %v156
      %v814 = vmul.f32 %v157, %v157
      %v815 = vmul.f32 %v158, %v158
      %832 = vrot.lane.b32.xlu0 %v800, 127
      %v833 = vpop.permute.xlu0 %832
      %834 = vrot.lane.b32.xlu0 %v801, 127
      %v835 = vpop.permute.xlu0 %834
      %836 = vrot.lane.b32.xlu0 %v802, 127
      %v837 = vpop.permute.xlu0 %836
      %838 = vrot.lane.b32.xlu0 %v803, 127
      %v839 = vpop.permute.xlu0 %838
      %840 = vrot.lane.b32.xlu0 %v804, 127
      %v841 = vpop.permute.xlu0 %840
      %842 = vrot.lane.b32.xlu0 %v805, 127
      %v843 = vpop.permute.xlu0 %842
      %844 = vrot.lane.b32.xlu0 %v806, 127
      %v845 = vpop.permute.xlu0 %844
      %846 = vrot.lane.b32.xlu0 %v807, 127
      %v847 = vpop.permute.xlu0 %846
      %848 = vrot.lane.b32.xlu0 %v808, 127
      %v849 = vpop.permute.xlu0 %848
      %850 = vrot.lane.b32.xlu0 %v809, 127
      %v851 = vpop.permute.xlu0 %850
      %852 = vrot.lane.b32.xlu0 %v810, 127
      %v853 = vpop.permute.xlu0 %852
      %854 = vrot.lane.b32.xlu0 %v811, 127
      %v855 = vpop.permute.xlu0 %854
      %856 = vrot.lane.b32.xlu0 %v812, 127
      %v857 = vpop.permute.xlu0 %856
      %858 = vrot.lane.b32.xlu0 %v813, 127
      %v859 = vpop.permute.xlu0 %858
      %860 = vrot.lane.b32.xlu0 %v814, 127
      %v861 = vpop.permute.xlu0 %860
      %862 = vrot.lane.b32.xlu0 %v815, 127
      %v863 = vpop.permute.xlu0 %862
      %v880 = vadd.f32 %v800, %v833
      %v881 = vadd.f32 %v801, %v835
      %v882 = vadd.f32 %v802, %v837
      %v883 = vadd.f32 %v803, %v839
      %v884 = vadd.f32 %v804, %v841
      %v885 = vadd.f32 %v805, %v843
      %v886 = vadd.f32 %v806, %v845
      %v887 = vadd.f32 %v807, %v847
      %v888 = vadd.f32 %v808, %v849
      %v889 = vadd.f32 %v809, %v851
      %v890 = vadd.f32 %v810, %v853
      %v891 = vadd.f32 %v811, %v855
      %v892 = vadd.f32 %v812, %v857
      %v893 = vadd.f32 %v813, %v859
      %v894 = vadd.f32 %v814, %v861
      %v895 = vadd.f32 %v815, %v863
      %896 = vrot.lane.b32.xlu0 %v800, 126
      %v897 = vpop.permute.xlu0 %896
      %898 = vrot.lane.b32.xlu0 %v801, 126
      %v899 = vpop.permute.xlu0 %898
      %900 = vrot.lane.b32.xlu0 %v802, 126
      %v901 = vpop.permute.xlu0 %900
      %902 = vrot.lane.b32.xlu0 %v803, 126
      %v903 = vpop.permute.xlu0 %902
      %904 = vrot.lane.b32.xlu0 %v804, 126
      %v905 = vpop.permute.xlu0 %904
      %906 = vrot.lane.b32.xlu0 %v805, 126
      %v907 = vpop.permute.xlu0 %906
      %908 = vrot.lane.b32.xlu0 %v806, 126
      %v909 = vpop.permute.xlu0 %908
      %910 = vrot.lane.b32.xlu0 %v807, 126
      %v911 = vpop.permute.xlu0 %910
      %912 = vrot.lane.b32.xlu0 %v808, 126
      %v913 = vpop.permute.xlu0 %912
      %914 = vrot.lane.b32.xlu0 %v809, 126
      %v915 = vpop.permute.xlu0 %914
      %916 = vrot.lane.b32.xlu0 %v810, 126
      %v917 = vpop.permute.xlu0 %916
      %918 = vrot.lane.b32.xlu0 %v811, 126
      %v919 = vpop.permute.xlu0 %918
      %920 = vrot.lane.b32.xlu0 %v812, 126
      %v921 = vpop.permute.xlu0 %920
      %922 = vrot.lane.b32.xlu0 %v813, 126
      %v923 = vpop.permute.xlu0 %922
      %924 = vrot.lane.b32.xlu0 %v814, 126
      %v925 = vpop.permute.xlu0 %924
      %926 = vrot.lane.b32.xlu0 %v815, 126
      %v927 = vpop.permute.xlu0 %926
      %v944 = vadd.f32 %v880, %v897
      %v945 = vadd.f32 %v881, %v899
      %v946 = vadd.f32 %v882, %v901
      %v947 = vadd.f32 %v883, %v903
      %v948 = vadd.f32 %v884, %v905
      %v949 = vadd.f32 %v885, %v907
      %v950 = vadd.f32 %v886, %v909
      %v951 = vadd.f32 %v887, %v911
      %v952 = vadd.f32 %v888, %v913
      %v953 = vadd.f32 %v889, %v915
      %v954 = vadd.f32 %v890, %v917
      %v955 = vadd.f32 %v891, %v919
      %v956 = vadd.f32 %v892, %v921
      %v957 = vadd.f32 %v893, %v923
      %v958 = vadd.f32 %v894, %v925
      %v959 = vadd.f32 %v895, %v927
      %v960 = vrsqrt.pop %v944
      %v961 = vmul.f32 %v944, %v960
      %vm962 = vcmp.eq.f32.partialorder %v944, inf
      %v963 = vsel %vm962, %v944, %v961
      %vm964 = vcmp.eq.f32.partialorder %v944, 0.0
      %v965 = vand.u32 %v944, 2147483648
      %v966 = vsel %vm964, %v965, %v963
      %v967 = vrsqrt.pop %v945
      %v968 = vmul.f32 %v945, %v967
      %vm969 = vcmp.eq.f32.partialorder %v945, inf
      %v970 = vsel %vm969, %v945, %v968
      %vm971 = vcmp.eq.f32.partialorder %v945, 0.0
      %v972 = vand.u32 %v945, 2147483648
      %v973 = vsel %vm971, %v972, %v970
      %v974 = vrsqrt.pop %v946
      %v975 = vmul.f32 %v946, %v974
      %vm976 = vcmp.eq.f32.partialorder %v946, inf
      %v977 = vsel %vm976, %v946, %v975
      %vm978 = vcmp.eq.f32.partialorder %v946, 0.0
      %v979 = vand.u32 %v946, 2147483648
      %v980 = vsel %vm978, %v979, %v977
      %v981 = vrsqrt.pop %v947
      %v982 = vmul.f32 %v947, %v981
      %vm983 = vcmp.eq.f32.partialorder %v947, inf
      %v984 = vsel %vm983, %v947, %v982
      %vm985 = vcmp.eq.f32.partialorder %v947, 0.0
      %v986 = vand.u32 %v947, 2147483648
      %v987 = vsel %vm985, %v986, %v984
      %v988 = vrsqrt.pop %v948
      %v989 = vmul.f32 %v948, %v988
      %vm990 = vcmp.eq.f32.partialorder %v948, inf
      %v991 = vsel %vm990, %v948, %v989
      %vm992 = vcmp.eq.f32.partialorder %v948, 0.0
      %v993 = vand.u32 %v948, 2147483648
      %v994 = vsel %vm992, %v993, %v991
      %v995 = vrsqrt.pop %v949
      %v996 = vmul.f32 %v949, %v995
      %vm997 = vcmp.eq.f32.partialorder %v949, inf
      %v998 = vsel %vm997, %v949, %v996
      %vm999 = vcmp.eq.f32.partialorder %v949, 0.0
      %v1000 = vand.u32 %v949, 2147483648
      %v1001 = vsel %vm999, %v1000, %v998
      %v1002 = vrsqrt.pop %v950
      %v1003 = vmul.f32 %v950, %v1002
      %vm1004 = vcmp.eq.f32.partialorder %v950, inf
      %v1005 = vsel %vm1004, %v950, %v1003
      %vm1006 = vcmp.eq.f32.partialorder %v950, 0.0
      %v1007 = vand.u32 %v950, 2147483648
      %v1008 = vsel %vm1006, %v1007, %v1005
      %v1009 = vrsqrt.pop %v951
      %v1010 = vmul.f32 %v951, %v1009
      %vm1011 = vcmp.eq.f32.partialorder %v951, inf
      %v1012 = vsel %vm1011, %v951, %v1010
      %vm1013 = vcmp.eq.f32.partialorder %v951, 0.0
      %v1014 = vand.u32 %v951, 2147483648
      %v1015 = vsel %vm1013, %v1014, %v1012
      %v1016 = vrsqrt.pop %v952
      %v1017 = vmul.f32 %v952, %v1016
      %vm1018 = vcmp.eq.f32.partialorder %v952, inf
      %v1019 = vsel %vm1018, %v952, %v1017
      %vm1020 = vcmp.eq.f32.partialorder %v952, 0.0
      %v1021 = vand.u32 %v952, 2147483648
      %v1022 = vsel %vm1020, %v1021, %v1019
      %v1023 = vrsqrt.pop %v953
      %v1024 = vmul.f32 %v953, %v1023
      %vm1025 = vcmp.eq.f32.partialorder %v953, inf
      %v1026 = vsel %vm1025, %v953, %v1024
      %vm1027 = vcmp.eq.f32.partialorder %v953, 0.0
      %v1028 = vand.u32 %v953, 2147483648
      %v1029 = vsel %vm1027, %v1028, %v1026
      %v1030 = vrsqrt.pop %v954
      %v1031 = vmul.f32 %v954, %v1030
      %vm1032 = vcmp.eq.f32.partialorder %v954, inf
      %v1033 = vsel %vm1032, %v954, %v1031
      %vm1034 = vcmp.eq.f32.partialorder %v954, 0.0
      %v1035 = vand.u32 %v954, 2147483648
      %v1036 = vsel %vm1034, %v1035, %v1033
      %v1037 = vrsqrt.pop %v955
      %v1038 = vmul.f32 %v955, %v1037
      %vm1039 = vcmp.eq.f32.partialorder %v955, inf
      %v1040 = vsel %vm1039, %v955, %v1038
      %vm1041 = vcmp.eq.f32.partialorder %v955, 0.0
      %v1042 = vand.u32 %v955, 2147483648
      %v1043 = vsel %vm1041, %v1042, %v1040
      %v1044 = vrsqrt.pop %v956
      %v1045 = vmul.f32 %v956, %v1044
      %vm1046 = vcmp.eq.f32.partialorder %v956, inf
      %v1047 = vsel %vm1046, %v956, %v1045
      %vm1048 = vcmp.eq.f32.partialorder %v956, 0.0
      %v1049 = vand.u32 %v956, 2147483648
      %v1050 = vsel %vm1048, %v1049, %v1047
      %v1051 = vrsqrt.pop %v957
      %v1052 = vmul.f32 %v957, %v1051
      %vm1053 = vcmp.eq.f32.partialorder %v957, inf
      %v1054 = vsel %vm1053, %v957, %v1052
      %vm1055 = vcmp.eq.f32.partialorder %v957, 0.0
      %v1056 = vand.u32 %v957, 2147483648
      %v1057 = vsel %vm1055, %v1056, %v1054
      %v1058 = vrsqrt.pop %v958
      %v1059 = vmul.f32 %v958, %v1058
      %vm1060 = vcmp.eq.f32.partialorder %v958, inf
      %v1061 = vsel %vm1060, %v958, %v1059
      %vm1062 = vcmp.eq.f32.partialorder %v958, 0.0
      %v1063 = vand.u32 %v958, 2147483648
      %v1064 = vsel %vm1062, %v1063, %v1061
      %v1065 = vrsqrt.pop %v959
      %v1066 = vmul.f32 %v959, %v1065
      %vm1067 = vcmp.eq.f32.partialorder %v959, inf
      %v1068 = vsel %vm1067, %v959, %v1066
      %vm1069 = vcmp.eq.f32.partialorder %v959, 0.0
      %v1070 = vand.u32 %v959, 2147483648
      %v1071 = vsel %vm1069, %v1070, %v1068
      %v1072 = vmax.f32 %v966, 1e-08
      %v1073 = vmax.f32 %v973, 1e-08
      %v1074 = vmax.f32 %v980, 1e-08
      %v1075 = vmax.f32 %v987, 1e-08
      %v1076 = vmax.f32 %v994, 1e-08
      %v1077 = vmax.f32 %v1001, 1e-08
      %v1078 = vmax.f32 %v1008, 1e-08
      %v1079 = vmax.f32 %v1015, 1e-08
      %v1080 = vmax.f32 %v1022, 1e-08
      %v1081 = vmax.f32 %v1029, 1e-08
      %v1082 = vmax.f32 %v1036, 1e-08
      %v1083 = vmax.f32 %v1043, 1e-08
      %v1084 = vmax.f32 %v1050, 1e-08
      %v1085 = vmax.f32 %v1057, 1e-08
      %v1086 = vmax.f32 %v1064, 1e-08
      %v1087 = vmax.f32 %v1071, 1e-08
      %v1088 = vrcp.pop %v1072
      %v1089 = vmul.f32 -1.0, %v1088
      %v1090 = vrcp.pop %v1073
      %v1091 = vmul.f32 -1.0, %v1090
      %v1092 = vrcp.pop %v1074
      %v1093 = vmul.f32 -1.0, %v1092
      %v1094 = vrcp.pop %v1075
      %v1095 = vmul.f32 -1.0, %v1094
      %v1096 = vrcp.pop %v1076
      %v1097 = vmul.f32 -1.0, %v1096
      %v1098 = vrcp.pop %v1077
      %v1099 = vmul.f32 -1.0, %v1098
      %v1100 = vrcp.pop %v1078
      %v1101 = vmul.f32 -1.0, %v1100
      %v1102 = vrcp.pop %v1079
      %v1103 = vmul.f32 -1.0, %v1102
      %v1104 = vrcp.pop %v1080
      %v1105 = vmul.f32 -1.0, %v1104
      %v1106 = vrcp.pop %v1081
      %v1107 = vmul.f32 -1.0, %v1106
      %v1108 = vrcp.pop %v1082
      %v1109 = vmul.f32 -1.0, %v1108
      %v1110 = vrcp.pop %v1083
      %v1111 = vmul.f32 -1.0, %v1110
      %v1112 = vrcp.pop %v1084
      %v1113 = vmul.f32 -1.0, %v1112
      %v1114 = vrcp.pop %v1085
      %v1115 = vmul.f32 -1.0, %v1114
      %v1116 = vrcp.pop %v1086
      %v1117 = vmul.f32 -1.0, %v1116
      %v1118 = vrcp.pop %v1087
      %v1119 = vmul.f32 -1.0, %v1118
      %v1120 = vmul.f32 %v702, -0.5
      %v1121 = vmul.f32 %v707, -0.5
      %v1122 = vmul.f32 %v712, -0.5
      %v1123 = vmul.f32 %v717, -0.5
      %v1124 = vmul.f32 %v722, -0.5
      %v1125 = vmul.f32 %v727, -0.5
      %v1126 = vmul.f32 %v732, -0.5
      %v1127 = vmul.f32 %v737, -0.5
      %v1128 = vmul.f32 %v742, -0.5
      %v1129 = vmul.f32 %v747, -0.5
      %v1130 = vmul.f32 %v752, -0.5
      %v1131 = vmul.f32 %v757, -0.5
      %v1132 = vmul.f32 %v762, -0.5
      %v1133 = vmul.f32 %v767, -0.5
      %v1134 = vmul.f32 %v772, -0.5
      %v1135 = vmul.f32 %v777, -0.5
      %v1136 = vmul.f32 %v1089, %v784
      %v1137 = vmul.f32 %v1091, %v785
      %v1138 = vmul.f32 %v1093, %v786
      %v1139 = vmul.f32 %v1095, %v787
      %v1140 = vmul.f32 %v1097, %v788
      %v1141 = vmul.f32 %v1099, %v789
      %v1142 = vmul.f32 %v1101, %v790
      %v1143 = vmul.f32 %v1103, %v791
      %v1144 = vmul.f32 %v1105, %v792
      %v1145 = vmul.f32 %v1107, %v793
      %v1146 = vmul.f32 %v1109, %v794
      %v1147 = vmul.f32 %v1111, %v795
      %v1148 = vmul.f32 %v1113, %v796
      %v1149 = vmul.f32 %v1115, %v797
      %v1150 = vmul.f32 %v1117, %v798
      %v1151 = vmul.f32 %v1119, %v799
      %v1152 = vadd.f32 %v1120, %v1136
      %v1153 = vadd.f32 %v1121, %v1137
      %v1154 = vadd.f32 %v1122, %v1138
      %v1155 = vadd.f32 %v1123, %v1139
      %v1156 = vadd.f32 %v1124, %v1140
      %v1157 = vadd.f32 %v1125, %v1141
      %v1158 = vadd.f32 %v1126, %v1142
      %v1159 = vadd.f32 %v1127, %v1143
      %v1160 = vadd.f32 %v1128, %v1144
      %v1161 = vadd.f32 %v1129, %v1145
      %v1162 = vadd.f32 %v1130, %v1146
      %v1163 = vadd.f32 %v1131, %v1147
      %v1164 = vadd.f32 %v1132, %v1148
      %v1165 = vadd.f32 %v1133, %v1149
      %v1166 = vadd.f32 %v1134, %v1150
      %v1167 = vadd.f32 %v1135, %v1151
      %1184 = vrot.lane.b32.xlu0 %v784, 127
      %v1185 = vpop.permute.xlu0 %1184
      %1186 = vrot.lane.b32.xlu0 %v785, 127
      %v1187 = vpop.permute.xlu0 %1186
      %1188 = vrot.lane.b32.xlu0 %v786, 127
      %v1189 = vpop.permute.xlu0 %1188
      %1190 = vrot.lane.b32.xlu0 %v787, 127
      %v1191 = vpop.permute.xlu0 %1190
      %1192 = vrot.lane.b32.xlu0 %v788, 127
      %v1193 = vpop.permute.xlu0 %1192
      %1194 = vrot.lane.b32.xlu0 %v789, 127
      %v1195 = vpop.permute.xlu0 %1194
      %1196 = vrot.lane.b32.xlu0 %v790, 127
      %v1197 = vpop.permute.xlu0 %1196
      %1198 = vrot.lane.b32.xlu0 %v791, 127
      %v1199 = vpop.permute.xlu0 %1198
      %1200 = vrot.lane.b32.xlu0 %v792, 127
      %v1201 = vpop.permute.xlu0 %1200
      %1202 = vrot.lane.b32.xlu0 %v793, 127
      %v1203 = vpop.permute.xlu0 %1202
      %1204 = vrot.lane.b32.xlu0 %v794, 127
      %v1205 = vpop.permute.xlu0 %1204
      %1206 = vrot.lane.b32.xlu0 %v795, 127
      %v1207 = vpop.permute.xlu0 %1206
      %1208 = vrot.lane.b32.xlu0 %v796, 127
      %v1209 = vpop.permute.xlu0 %1208
      %1210 = vrot.lane.b32.xlu0 %v797, 127
      %v1211 = vpop.permute.xlu0 %1210
      %1212 = vrot.lane.b32.xlu0 %v798, 127
      %v1213 = vpop.permute.xlu0 %1212
      %1214 = vrot.lane.b32.xlu0 %v799, 127
      %v1215 = vpop.permute.xlu0 %1214
      %v1232 = vmul.f32 %v1089, %v1185
      %v1233 = vmul.f32 %v1091, %v1187
      %v1234 = vmul.f32 %v1093, %v1189
      %v1235 = vmul.f32 %v1095, %v1191
      %v1236 = vmul.f32 %v1097, %v1193
      %v1237 = vmul.f32 %v1099, %v1195
      %v1238 = vmul.f32 %v1101, %v1197
      %v1239 = vmul.f32 %v1103, %v1199
      %v1240 = vmul.f32 %v1105, %v1201
      %v1241 = vmul.f32 %v1107, %v1203
      %v1242 = vmul.f32 %v1109, %v1205
      %v1243 = vmul.f32 %v1111, %v1207
      %v1244 = vmul.f32 %v1113, %v1209
      %v1245 = vmul.f32 %v1115, %v1211
      %v1246 = vmul.f32 %v1117, %v1213
      %v1247 = vmul.f32 %v1119, %v1215
      %1264 = vrot.lane.b32.xlu0 %v1232, 1
      %v1265 = vpop.permute.xlu0 %1264
      %1266 = vrot.lane.b32.xlu0 %v1233, 1
      %v1267 = vpop.permute.xlu0 %1266
      %1268 = vrot.lane.b32.xlu0 %v1234, 1
      %v1269 = vpop.permute.xlu0 %1268
      %1270 = vrot.lane.b32.xlu0 %v1235, 1
      %v1271 = vpop.permute.xlu0 %1270
      %1272 = vrot.lane.b32.xlu0 %v1236, 1
      %v1273 = vpop.permute.xlu0 %1272
      %1274 = vrot.lane.b32.xlu0 %v1237, 1
      %v1275 = vpop.permute.xlu0 %1274
      %1276 = vrot.lane.b32.xlu0 %v1238, 1
      %v1277 = vpop.permute.xlu0 %1276
      %1278 = vrot.lane.b32.xlu0 %v1239, 1
      %v1279 = vpop.permute.xlu0 %1278
      %1280 = vrot.lane.b32.xlu0 %v1240, 1
      %v1281 = vpop.permute.xlu0 %1280
      %1282 = vrot.lane.b32.xlu0 %v1241, 1
      %v1283 = vpop.permute.xlu0 %1282
      %1284 = vrot.lane.b32.xlu0 %v1242, 1
      %v1285 = vpop.permute.xlu0 %1284
      %1286 = vrot.lane.b32.xlu0 %v1243, 1
      %v1287 = vpop.permute.xlu0 %1286
      %1288 = vrot.lane.b32.xlu0 %v1244, 1
      %v1289 = vpop.permute.xlu0 %1288
      %1290 = vrot.lane.b32.xlu0 %v1245, 1
      %v1291 = vpop.permute.xlu0 %1290
      %1292 = vrot.lane.b32.xlu0 %v1246, 1
      %v1293 = vpop.permute.xlu0 %1292
      %1294 = vrot.lane.b32.xlu0 %v1247, 1
      %v1295 = vpop.permute.xlu0 %1294
      %v1312 = vadd.f32 %v1120, %v1265
      %v1313 = vadd.f32 %v1121, %v1267
      %v1314 = vadd.f32 %v1122, %v1269
      %v1315 = vadd.f32 %v1123, %v1271
      %v1316 = vadd.f32 %v1124, %v1273
      %v1317 = vadd.f32 %v1125, %v1275
      %v1318 = vadd.f32 %v1126, %v1277
      %v1319 = vadd.f32 %v1127, %v1279
      %v1320 = vadd.f32 %v1128, %v1281
      %v1321 = vadd.f32 %v1129, %v1283
      %v1322 = vadd.f32 %v1130, %v1285
      %v1323 = vadd.f32 %v1131, %v1287
      %v1324 = vadd.f32 %v1132, %v1289
      %v1325 = vadd.f32 %v1133, %v1291
      %v1326 = vadd.f32 %v1134, %v1293
      %v1327 = vadd.f32 %v1135, %v1295
      %v1328 = vmul.f32 %v784, %v1152
      %v1329 = vmul.f32 %v785, %v1153
      %v1330 = vmul.f32 %v786, %v1154
      %v1331 = vmul.f32 %v787, %v1155
      %v1332 = vmul.f32 %v788, %v1156
      %v1333 = vmul.f32 %v789, %v1157
      %v1334 = vmul.f32 %v790, %v1158
      %v1335 = vmul.f32 %v791, %v1159
      %v1336 = vmul.f32 %v792, %v1160
      %v1337 = vmul.f32 %v793, %v1161
      %v1338 = vmul.f32 %v794, %v1162
      %v1339 = vmul.f32 %v795, %v1163
      %v1340 = vmul.f32 %v796, %v1164
      %v1341 = vmul.f32 %v797, %v1165
      %v1342 = vmul.f32 %v798, %v1166
      %v1343 = vmul.f32 %v799, %v1167
      %v1344 = vmul.f32 %v784, %v1312
      %v1345 = vmul.f32 %v785, %v1313
      %v1346 = vmul.f32 %v786, %v1314
      %v1347 = vmul.f32 %v787, %v1315
      %v1348 = vmul.f32 %v788, %v1316
      %v1349 = vmul.f32 %v789, %v1317
      %v1350 = vmul.f32 %v790, %v1318
      %v1351 = vmul.f32 %v791, %v1319
      %v1352 = vmul.f32 %v792, %v1320
      %v1353 = vmul.f32 %v793, %v1321
      %v1354 = vmul.f32 %v794, %v1322
      %v1355 = vmul.f32 %v795, %v1323
      %v1356 = vmul.f32 %v796, %v1324
      %v1357 = vmul.f32 %v797, %v1325
      %v1358 = vmul.f32 %v798, %v1326
      %v1359 = vmul.f32 %v799, %v1327
      %1376 = vrot.lane.b32.xlu0 %v1344, 127
      %v1377 = vpop.permute.xlu0 %1376
      %1378 = vrot.lane.b32.xlu0 %v1345, 127
      %v1379 = vpop.permute.xlu0 %1378
      %1380 = vrot.lane.b32.xlu0 %v1346, 127
      %v1381 = vpop.permute.xlu0 %1380
      %1382 = vrot.lane.b32.xlu0 %v1347, 127
      %v1383 = vpop.permute.xlu0 %1382
      %1384 = vrot.lane.b32.xlu0 %v1348, 127
      %v1385 = vpop.permute.xlu0 %1384
      %1386 = vrot.lane.b32.xlu0 %v1349, 127
      %v1387 = vpop.permute.xlu0 %1386
      %1388 = vrot.lane.b32.xlu0 %v1350, 127
      %v1389 = vpop.permute.xlu0 %1388
      %1390 = vrot.lane.b32.xlu0 %v1351, 127
      %v1391 = vpop.permute.xlu0 %1390
      %1392 = vrot.lane.b32.xlu0 %v1352, 127
      %v1393 = vpop.permute.xlu0 %1392
      %1394 = vrot.lane.b32.xlu0 %v1353, 127
      %v1395 = vpop.permute.xlu0 %1394
      %1396 = vrot.lane.b32.xlu0 %v1354, 127
      %v1397 = vpop.permute.xlu0 %1396
      %1398 = vrot.lane.b32.xlu0 %v1355, 127
      %v1399 = vpop.permute.xlu0 %1398
      %1400 = vrot.lane.b32.xlu0 %v1356, 127
      %v1401 = vpop.permute.xlu0 %1400
      %1402 = vrot.lane.b32.xlu0 %v1357, 127
      %v1403 = vpop.permute.xlu0 %1402
      %1404 = vrot.lane.b32.xlu0 %v1358, 127
      %v1405 = vpop.permute.xlu0 %1404
      %1406 = vrot.lane.b32.xlu0 %v1359, 127
      %v1407 = vpop.permute.xlu0 %1406
      %v1424 = vadd.f32 %v1328, %v1377
      %v1425 = vadd.f32 %v1329, %v1379
      %v1426 = vadd.f32 %v1330, %v1381
      %v1427 = vadd.f32 %v1331, %v1383
      %v1428 = vadd.f32 %v1332, %v1385
      %v1429 = vadd.f32 %v1333, %v1387
      %v1430 = vadd.f32 %v1334, %v1389
      %v1431 = vadd.f32 %v1335, %v1391
      %v1432 = vadd.f32 %v1336, %v1393
      %v1433 = vadd.f32 %v1337, %v1395
      %v1434 = vadd.f32 %v1338, %v1397
      %v1435 = vadd.f32 %v1339, %v1399
      %v1436 = vadd.f32 %v1340, %v1401
      %v1437 = vadd.f32 %v1341, %v1403
      %v1438 = vadd.f32 %v1342, %v1405
      %v1439 = vadd.f32 %v1343, %v1407
      %v1440 = vmul.f32 %v784, %v784
      %v1441 = vmul.f32 %v785, %v785
      %v1442 = vmul.f32 %v786, %v786
      %v1443 = vmul.f32 %v787, %v787
      %v1444 = vmul.f32 %v788, %v788
      %v1445 = vmul.f32 %v789, %v789
      %v1446 = vmul.f32 %v790, %v790
      %v1447 = vmul.f32 %v791, %v791
      %v1448 = vmul.f32 %v792, %v792
      %v1449 = vmul.f32 %v793, %v793
      %v1450 = vmul.f32 %v794, %v794
      %v1451 = vmul.f32 %v795, %v795
      %v1452 = vmul.f32 %v796, %v796
      %v1453 = vmul.f32 %v797, %v797
      %v1454 = vmul.f32 %v798, %v798
      %v1455 = vmul.f32 %v799, %v799
      %1472 = vrot.lane.b32.xlu0 %v1440, 127
      %v1473 = vpop.permute.xlu0 %1472
      %1474 = vrot.lane.b32.xlu0 %v1441, 127
      %v1475 = vpop.permute.xlu0 %1474
      %1476 = vrot.lane.b32.xlu0 %v1442, 127
      %v1477 = vpop.permute.xlu0 %1476
      %1478 = vrot.lane.b32.xlu0 %v1443, 127
      %v1479 = vpop.permute.xlu0 %1478
      %1480 = vrot.lane.b32.xlu0 %v1444, 127
      %v1481 = vpop.permute.xlu0 %1480
      %1482 = vrot.lane.b32.xlu0 %v1445, 127
      %v1483 = vpop.permute.xlu0 %1482
      %1484 = vrot.lane.b32.xlu0 %v1446, 127
      %v1485 = vpop.permute.xlu0 %1484
      %1486 = vrot.lane.b32.xlu0 %v1447, 127
      %v1487 = vpop.permute.xlu0 %1486
      %1488 = vrot.lane.b32.xlu0 %v1448, 127
      %v1489 = vpop.permute.xlu0 %1488
      %1490 = vrot.lane.b32.xlu0 %v1449, 127
      %v1491 = vpop.permute.xlu0 %1490
      %1492 = vrot.lane.b32.xlu0 %v1450, 127
      %v1493 = vpop.permute.xlu0 %1492
      %1494 = vrot.lane.b32.xlu0 %v1451, 127
      %v1495 = vpop.permute.xlu0 %1494
      %1496 = vrot.lane.b32.xlu0 %v1452, 127
      %v1497 = vpop.permute.xlu0 %1496
      %1498 = vrot.lane.b32.xlu0 %v1453, 127
      %v1499 = vpop.permute.xlu0 %1498
      %1500 = vrot.lane.b32.xlu0 %v1454, 127
      %v1501 = vpop.permute.xlu0 %1500
      %1502 = vrot.lane.b32.xlu0 %v1455, 127
      %v1503 = vpop.permute.xlu0 %1502
      %v1520 = vadd.f32 %v1440, %v1473
      %v1521 = vadd.f32 %v1441, %v1475
      %v1522 = vadd.f32 %v1442, %v1477
      %v1523 = vadd.f32 %v1443, %v1479
      %v1524 = vadd.f32 %v1444, %v1481
      %v1525 = vadd.f32 %v1445, %v1483
      %v1526 = vadd.f32 %v1446, %v1485
      %v1527 = vadd.f32 %v1447, %v1487
      %v1528 = vadd.f32 %v1448, %v1489
      %v1529 = vadd.f32 %v1449, %v1491
      %v1530 = vadd.f32 %v1450, %v1493
      %v1531 = vadd.f32 %v1451, %v1495
      %v1532 = vadd.f32 %v1452, %v1497
      %v1533 = vadd.f32 %v1453, %v1499
      %v1534 = vadd.f32 %v1454, %v1501
      %v1535 = vadd.f32 %v1455, %v1503
      %v1536 = vmul.f32 %v1152, %v1152
      %v1537 = vmul.f32 %v1153, %v1153
      %v1538 = vmul.f32 %v1154, %v1154
      %v1539 = vmul.f32 %v1155, %v1155
      %v1540 = vmul.f32 %v1156, %v1156
      %v1541 = vmul.f32 %v1157, %v1157
      %v1542 = vmul.f32 %v1158, %v1158
      %v1543 = vmul.f32 %v1159, %v1159
      %v1544 = vmul.f32 %v1160, %v1160
      %v1545 = vmul.f32 %v1161, %v1161
      %v1546 = vmul.f32 %v1162, %v1162
      %v1547 = vmul.f32 %v1163, %v1163
      %v1548 = vmul.f32 %v1164, %v1164
      %v1549 = vmul.f32 %v1165, %v1165
      %v1550 = vmul.f32 %v1166, %v1166
      %v1551 = vmul.f32 %v1167, %v1167
      %v1552 = vmul.f32 %v1312, %v1312
      %v1553 = vmul.f32 %v1313, %v1313
      %v1554 = vmul.f32 %v1314, %v1314
      %v1555 = vmul.f32 %v1315, %v1315
      %v1556 = vmul.f32 %v1316, %v1316
      %v1557 = vmul.f32 %v1317, %v1317
      %v1558 = vmul.f32 %v1318, %v1318
      %v1559 = vmul.f32 %v1319, %v1319
      %v1560 = vmul.f32 %v1320, %v1320
      %v1561 = vmul.f32 %v1321, %v1321
      %v1562 = vmul.f32 %v1322, %v1322
      %v1563 = vmul.f32 %v1323, %v1323
      %v1564 = vmul.f32 %v1324, %v1324
      %v1565 = vmul.f32 %v1325, %v1325
      %v1566 = vmul.f32 %v1326, %v1326
      %v1567 = vmul.f32 %v1327, %v1327
      %1584 = vrot.lane.b32.xlu0 %v1552, 127
      %v1585 = vpop.permute.xlu0 %1584
      %1586 = vrot.lane.b32.xlu0 %v1553, 127
      %v1587 = vpop.permute.xlu0 %1586
      %1588 = vrot.lane.b32.xlu0 %v1554, 127
      %v1589 = vpop.permute.xlu0 %1588
      %1590 = vrot.lane.b32.xlu0 %v1555, 127
      %v1591 = vpop.permute.xlu0 %1590
      %1592 = vrot.lane.b32.xlu0 %v1556, 127
      %v1593 = vpop.permute.xlu0 %1592
      %1594 = vrot.lane.b32.xlu0 %v1557, 127
      %v1595 = vpop.permute.xlu0 %1594
      %1596 = vrot.lane.b32.xlu0 %v1558, 127
      %v1597 = vpop.permute.xlu0 %1596
      %1598 = vrot.lane.b32.xlu0 %v1559, 127
      %v1599 = vpop.permute.xlu0 %1598
      %1600 = vrot.lane.b32.xlu0 %v1560, 127
      %v1601 = vpop.permute.xlu0 %1600
      %1602 = vrot.lane.b32.xlu0 %v1561, 127
      %v1603 = vpop.permute.xlu0 %1602
      %1604 = vrot.lane.b32.xlu0 %v1562, 127
      %v1605 = vpop.permute.xlu0 %1604
      %1606 = vrot.lane.b32.xlu0 %v1563, 127
      %v1607 = vpop.permute.xlu0 %1606
      %1608 = vrot.lane.b32.xlu0 %v1564, 127
      %v1609 = vpop.permute.xlu0 %1608
      %1610 = vrot.lane.b32.xlu0 %v1565, 127
      %v1611 = vpop.permute.xlu0 %1610
      %1612 = vrot.lane.b32.xlu0 %v1566, 127
      %v1613 = vpop.permute.xlu0 %1612
      %1614 = vrot.lane.b32.xlu0 %v1567, 127
      %v1615 = vpop.permute.xlu0 %1614
      %v1632 = vadd.f32 %v1536, %v1585
      %v1633 = vadd.f32 %v1537, %v1587
      %v1634 = vadd.f32 %v1538, %v1589
      %v1635 = vadd.f32 %v1539, %v1591
      %v1636 = vadd.f32 %v1540, %v1593
      %v1637 = vadd.f32 %v1541, %v1595
      %v1638 = vadd.f32 %v1542, %v1597
      %v1639 = vadd.f32 %v1543, %v1599
      %v1640 = vadd.f32 %v1544, %v1601
      %v1641 = vadd.f32 %v1545, %v1603
      %v1642 = vadd.f32 %v1546, %v1605
      %v1643 = vadd.f32 %v1547, %v1607
      %v1644 = vadd.f32 %v1548, %v1609
      %v1645 = vadd.f32 %v1549, %v1611
      %v1646 = vadd.f32 %v1550, %v1613
      %v1647 = vadd.f32 %v1551, %v1615
      %1648 = vrot.lane.b32.xlu0 %v143, 120
      %v1649 = vpop.permute.xlu0 %1648
      %1650 = vrot.lane.b32.xlu0 %v144, 120
      %v1651 = vpop.permute.xlu0 %1650
      %1652 = vrot.lane.b32.xlu0 %v145, 120
      %v1653 = vpop.permute.xlu0 %1652
      %1654 = vrot.lane.b32.xlu0 %v146, 120
      %v1655 = vpop.permute.xlu0 %1654
      %1656 = vrot.lane.b32.xlu0 %v147, 120
      %v1657 = vpop.permute.xlu0 %1656
      %1658 = vrot.lane.b32.xlu0 %v148, 120
      %v1659 = vpop.permute.xlu0 %1658
      %1660 = vrot.lane.b32.xlu0 %v149, 120
      %v1661 = vpop.permute.xlu0 %1660
      %1662 = vrot.lane.b32.xlu0 %v150, 120
      %v1663 = vpop.permute.xlu0 %1662
      %1664 = vrot.lane.b32.xlu0 %v151, 120
      %v1665 = vpop.permute.xlu0 %1664
      %1666 = vrot.lane.b32.xlu0 %v152, 120
      %v1667 = vpop.permute.xlu0 %1666
      %1668 = vrot.lane.b32.xlu0 %v153, 120
      %v1669 = vpop.permute.xlu0 %1668
      %1670 = vrot.lane.b32.xlu0 %v154, 120
      %v1671 = vpop.permute.xlu0 %1670
      %1672 = vrot.lane.b32.xlu0 %v155, 120
      %v1673 = vpop.permute.xlu0 %1672
      %1674 = vrot.lane.b32.xlu0 %v156, 120
      %v1675 = vpop.permute.xlu0 %1674
      %1676 = vrot.lane.b32.xlu0 %v157, 120
      %v1677 = vpop.permute.xlu0 %1676
      %1678 = vrot.lane.b32.xlu0 %v158, 120
      %v1679 = vpop.permute.xlu0 %1678
      %v1696 = vsub.f32 %v784, %v1649
      %v1697 = vsub.f32 %v785, %v1651
      %v1698 = vsub.f32 %v786, %v1653
      %v1699 = vsub.f32 %v787, %v1655
      %v1700 = vsub.f32 %v788, %v1657
      %v1701 = vsub.f32 %v789, %v1659
      %v1702 = vsub.f32 %v790, %v1661
      %v1703 = vsub.f32 %v791, %v1663
      %v1704 = vsub.f32 %v792, %v1665
      %v1705 = vsub.f32 %v793, %v1667
      %v1706 = vsub.f32 %v794, %v1669
      %v1707 = vsub.f32 %v795, %v1671
      %v1708 = vsub.f32 %v796, %v1673
      %v1709 = vsub.f32 %v797, %v1675
      %v1710 = vsub.f32 %v798, %v1677
      %v1711 = vsub.f32 %v799, %v1679
      %v1712 = vmul.f32 %v1696, %v1696
      %v1713 = vmul.f32 %v1697, %v1697
      %v1714 = vmul.f32 %v1698, %v1698
      %v1715 = vmul.f32 %v1699, %v1699
      %v1716 = vmul.f32 %v1700, %v1700
      %v1717 = vmul.f32 %v1701, %v1701
      %v1718 = vmul.f32 %v1702, %v1702
      %v1719 = vmul.f32 %v1703, %v1703
      %v1720 = vmul.f32 %v1704, %v1704
      %v1721 = vmul.f32 %v1705, %v1705
      %v1722 = vmul.f32 %v1706, %v1706
      %v1723 = vmul.f32 %v1707, %v1707
      %v1724 = vmul.f32 %v1708, %v1708
      %v1725 = vmul.f32 %v1709, %v1709
      %v1726 = vmul.f32 %v1710, %v1710
      %v1727 = vmul.f32 %v1711, %v1711
      %1744 = vrot.lane.b32.xlu0 %v1712, 127
      %v1745 = vpop.permute.xlu0 %1744
      %1746 = vrot.lane.b32.xlu0 %v1713, 127
      %v1747 = vpop.permute.xlu0 %1746
      %1748 = vrot.lane.b32.xlu0 %v1714, 127
      %v1749 = vpop.permute.xlu0 %1748
      %1750 = vrot.lane.b32.xlu0 %v1715, 127
      %v1751 = vpop.permute.xlu0 %1750
      %1752 = vrot.lane.b32.xlu0 %v1716, 127
      %v1753 = vpop.permute.xlu0 %1752
      %1754 = vrot.lane.b32.xlu0 %v1717, 127
      %v1755 = vpop.permute.xlu0 %1754
      %1756 = vrot.lane.b32.xlu0 %v1718, 127
      %v1757 = vpop.permute.xlu0 %1756
      %1758 = vrot.lane.b32.xlu0 %v1719, 127
      %v1759 = vpop.permute.xlu0 %1758
      %1760 = vrot.lane.b32.xlu0 %v1720, 127
      %v1761 = vpop.permute.xlu0 %1760
      %1762 = vrot.lane.b32.xlu0 %v1721, 127
      %v1763 = vpop.permute.xlu0 %1762
      %1764 = vrot.lane.b32.xlu0 %v1722, 127
      %v1765 = vpop.permute.xlu0 %1764
      %1766 = vrot.lane.b32.xlu0 %v1723, 127
      %v1767 = vpop.permute.xlu0 %1766
      %1768 = vrot.lane.b32.xlu0 %v1724, 127
      %v1769 = vpop.permute.xlu0 %1768
      %1770 = vrot.lane.b32.xlu0 %v1725, 127
      %v1771 = vpop.permute.xlu0 %1770
      %1772 = vrot.lane.b32.xlu0 %v1726, 127
      %v1773 = vpop.permute.xlu0 %1772
      %1774 = vrot.lane.b32.xlu0 %v1727, 127
      %v1775 = vpop.permute.xlu0 %1774
      %v1792 = vadd.f32 %v1712, %v1745
      %v1793 = vadd.f32 %v1713, %v1747
      %v1794 = vadd.f32 %v1714, %v1749
      %v1795 = vadd.f32 %v1715, %v1751
      %v1796 = vadd.f32 %v1716, %v1753
      %v1797 = vadd.f32 %v1717, %v1755
      %v1798 = vadd.f32 %v1718, %v1757
      %v1799 = vadd.f32 %v1719, %v1759
      %v1800 = vadd.f32 %v1720, %v1761
      %v1801 = vadd.f32 %v1721, %v1763
      %v1802 = vadd.f32 %v1722, %v1765
      %v1803 = vadd.f32 %v1723, %v1767
      %v1804 = vadd.f32 %v1724, %v1769
      %v1805 = vadd.f32 %v1725, %v1771
      %v1806 = vadd.f32 %v1726, %v1773
      %v1807 = vadd.f32 %v1727, %v1775
      %v1808 = vadd.f32 %v143, 1e-12
      %v1809 = vadd.f32 %v144, 1e-12
      %v1810 = vadd.f32 %v145, 1e-12
      %v1811 = vadd.f32 %v146, 1e-12
      %v1812 = vadd.f32 %v147, 1e-12
      %v1813 = vadd.f32 %v148, 1e-12
      %v1814 = vadd.f32 %v149, 1e-12
      %v1815 = vadd.f32 %v150, 1e-12
      %v1816 = vadd.f32 %v151, 1e-12
      %v1817 = vadd.f32 %v152, 1e-12
      %v1818 = vadd.f32 %v153, 1e-12
      %v1819 = vadd.f32 %v154, 1e-12
      %v1820 = vadd.f32 %v155, 1e-12
      %v1821 = vadd.f32 %v156, 1e-12
      %v1822 = vadd.f32 %v157, 1e-12
      %v1823 = vadd.f32 %v158, 1e-12
      %1840 = vrot.lane.b32.xlu0 %v1808, 118
      %v1841 = vpop.permute.xlu0 %1840
      %1842 = vrot.lane.b32.xlu0 %v1809, 118
      %v1843 = vpop.permute.xlu0 %1842
      %1844 = vrot.lane.b32.xlu0 %v1810, 118
      %v1845 = vpop.permute.xlu0 %1844
      %1846 = vrot.lane.b32.xlu0 %v1811, 118
      %v1847 = vpop.permute.xlu0 %1846
      %1848 = vrot.lane.b32.xlu0 %v1812, 118
      %v1849 = vpop.permute.xlu0 %1848
      %1850 = vrot.lane.b32.xlu0 %v1813, 118
      %v1851 = vpop.permute.xlu0 %1850
      %1852 = vrot.lane.b32.xlu0 %v1814, 118
      %v1853 = vpop.permute.xlu0 %1852
      %1854 = vrot.lane.b32.xlu0 %v1815, 118
      %v1855 = vpop.permute.xlu0 %1854
      %1856 = vrot.lane.b32.xlu0 %v1816, 118
      %v1857 = vpop.permute.xlu0 %1856
      %1858 = vrot.lane.b32.xlu0 %v1817, 118
      %v1859 = vpop.permute.xlu0 %1858
      %1860 = vrot.lane.b32.xlu0 %v1818, 118
      %v1861 = vpop.permute.xlu0 %1860
      %1862 = vrot.lane.b32.xlu0 %v1819, 118
      %v1863 = vpop.permute.xlu0 %1862
      %1864 = vrot.lane.b32.xlu0 %v1820, 118
      %v1865 = vpop.permute.xlu0 %1864
      %1866 = vrot.lane.b32.xlu0 %v1821, 118
      %v1867 = vpop.permute.xlu0 %1866
      %1868 = vrot.lane.b32.xlu0 %v1822, 118
      %v1869 = vpop.permute.xlu0 %1868
      %1870 = vrot.lane.b32.xlu0 %v1823, 118
      %v1871 = vpop.permute.xlu0 %1870
      %v1888 = vrcp.pop %v1841
      %v1889 = vmul.f32 %v1520, %v1888
      %v1890 = vrcp.pop %v1843
      %v1891 = vmul.f32 %v1521, %v1890
      %v1892 = vrcp.pop %v1845
      %v1893 = vmul.f32 %v1522, %v1892
      %v1894 = vrcp.pop %v1847
      %v1895 = vmul.f32 %v1523, %v1894
      %v1896 = vrcp.pop %v1849
      %v1897 = vmul.f32 %v1524, %v1896
      %v1898 = vrcp.pop %v1851
      %v1899 = vmul.f32 %v1525, %v1898
      %v1900 = vrcp.pop %v1853
      %v1901 = vmul.f32 %v1526, %v1900
      %v1902 = vrcp.pop %v1855
      %v1903 = vmul.f32 %v1527, %v1902
      %v1904 = vrcp.pop %v1857
      %v1905 = vmul.f32 %v1528, %v1904
      %v1906 = vrcp.pop %v1859
      %v1907 = vmul.f32 %v1529, %v1906
      %v1908 = vrcp.pop %v1861
      %v1909 = vmul.f32 %v1530, %v1908
      %v1910 = vrcp.pop %v1863
      %v1911 = vmul.f32 %v1531, %v1910
      %v1912 = vrcp.pop %v1865
      %v1913 = vmul.f32 %v1532, %v1912
      %v1914 = vrcp.pop %v1867
      %v1915 = vmul.f32 %v1533, %v1914
      %v1916 = vrcp.pop %v1869
      %v1917 = vmul.f32 %v1534, %v1916
      %v1918 = vrcp.pop %v1871
      %v1919 = vmul.f32 %v1535, %v1918
      %1936 = vrot.lane.b32.xlu0 %v1520, 1
      %v1937 = vpop.permute.xlu0 %1936
      %1938 = vrot.lane.b32.xlu0 %v1521, 1
      %v1939 = vpop.permute.xlu0 %1938
      %1940 = vrot.lane.b32.xlu0 %v1522, 1
      %v1941 = vpop.permute.xlu0 %1940
      %1942 = vrot.lane.b32.xlu0 %v1523, 1
      %v1943 = vpop.permute.xlu0 %1942
      %1944 = vrot.lane.b32.xlu0 %v1524, 1
      %v1945 = vpop.permute.xlu0 %1944
      %1946 = vrot.lane.b32.xlu0 %v1525, 1
      %v1947 = vpop.permute.xlu0 %1946
      %1948 = vrot.lane.b32.xlu0 %v1526, 1
      %v1949 = vpop.permute.xlu0 %1948
      %1950 = vrot.lane.b32.xlu0 %v1527, 1
      %v1951 = vpop.permute.xlu0 %1950
      %1952 = vrot.lane.b32.xlu0 %v1528, 1
      %v1953 = vpop.permute.xlu0 %1952
      %1954 = vrot.lane.b32.xlu0 %v1529, 1
      %v1955 = vpop.permute.xlu0 %1954
      %1956 = vrot.lane.b32.xlu0 %v1530, 1
      %v1957 = vpop.permute.xlu0 %1956
      %1958 = vrot.lane.b32.xlu0 %v1531, 1
      %v1959 = vpop.permute.xlu0 %1958
      %1960 = vrot.lane.b32.xlu0 %v1532, 1
      %v1961 = vpop.permute.xlu0 %1960
      %1962 = vrot.lane.b32.xlu0 %v1533, 1
      %v1963 = vpop.permute.xlu0 %1962
      %1964 = vrot.lane.b32.xlu0 %v1534, 1
      %v1965 = vpop.permute.xlu0 %1964
      %1966 = vrot.lane.b32.xlu0 %v1535, 1
      %v1967 = vpop.permute.xlu0 %1966
      %2000 = vrot.lane.b32.xlu0 %v1632, 2
      %v2001 = vpop.permute.xlu0 %2000
      %2002 = vrot.lane.b32.xlu0 %v1633, 2
      %v2003 = vpop.permute.xlu0 %2002
      %2004 = vrot.lane.b32.xlu0 %v1634, 2
      %v2005 = vpop.permute.xlu0 %2004
      %2006 = vrot.lane.b32.xlu0 %v1635, 2
      %v2007 = vpop.permute.xlu0 %2006
      %2008 = vrot.lane.b32.xlu0 %v1636, 2
      %v2009 = vpop.permute.xlu0 %2008
      %2010 = vrot.lane.b32.xlu0 %v1637, 2
      %v2011 = vpop.permute.xlu0 %2010
      %2012 = vrot.lane.b32.xlu0 %v1638, 2
      %v2013 = vpop.permute.xlu0 %2012
      %2014 = vrot.lane.b32.xlu0 %v1639, 2
      %v2015 = vpop.permute.xlu0 %2014
      %2016 = vrot.lane.b32.xlu0 %v1640, 2
      %v2017 = vpop.permute.xlu0 %2016
      %2018 = vrot.lane.b32.xlu0 %v1641, 2
      %v2019 = vpop.permute.xlu0 %2018
      %2020 = vrot.lane.b32.xlu0 %v1642, 2
      %v2021 = vpop.permute.xlu0 %2020
      %2022 = vrot.lane.b32.xlu0 %v1643, 2
      %v2023 = vpop.permute.xlu0 %2022
      %2024 = vrot.lane.b32.xlu0 %v1644, 2
      %v2025 = vpop.permute.xlu0 %2024
      %2026 = vrot.lane.b32.xlu0 %v1645, 2
      %v2027 = vpop.permute.xlu0 %2026
      %2028 = vrot.lane.b32.xlu0 %v1646, 2
      %v2029 = vpop.permute.xlu0 %2028
      %2030 = vrot.lane.b32.xlu0 %v1647, 2
      %v2031 = vpop.permute.xlu0 %2030
      %2064 = vrot.lane.b32.xlu0 %v1792, 3
      %v2065 = vpop.permute.xlu0 %2064
      %2066 = vrot.lane.b32.xlu0 %v1793, 3
      %v2067 = vpop.permute.xlu0 %2066
      %2068 = vrot.lane.b32.xlu0 %v1794, 3
      %v2069 = vpop.permute.xlu0 %2068
      %2070 = vrot.lane.b32.xlu0 %v1795, 3
      %v2071 = vpop.permute.xlu0 %2070
      %2072 = vrot.lane.b32.xlu0 %v1796, 3
      %v2073 = vpop.permute.xlu0 %2072
      %2074 = vrot.lane.b32.xlu0 %v1797, 3
      %v2075 = vpop.permute.xlu0 %2074
      %2076 = vrot.lane.b32.xlu0 %v1798, 3
      %v2077 = vpop.permute.xlu0 %2076
      %2078 = vrot.lane.b32.xlu0 %v1799, 3
      %v2079 = vpop.permute.xlu0 %2078
      %2080 = vrot.lane.b32.xlu0 %v1800, 3
      %v2081 = vpop.permute.xlu0 %2080
      %2082 = vrot.lane.b32.xlu0 %v1801, 3
      %v2083 = vpop.permute.xlu0 %2082
      %2084 = vrot.lane.b32.xlu0 %v1802, 3
      %v2085 = vpop.permute.xlu0 %2084
      %2086 = vrot.lane.b32.xlu0 %v1803, 3
      %v2087 = vpop.permute.xlu0 %2086
      %2088 = vrot.lane.b32.xlu0 %v1804, 3
      %v2089 = vpop.permute.xlu0 %2088
      %2090 = vrot.lane.b32.xlu0 %v1805, 3
      %v2091 = vpop.permute.xlu0 %2090
      %2092 = vrot.lane.b32.xlu0 %v1806, 3
      %v2093 = vpop.permute.xlu0 %2092
      %2094 = vrot.lane.b32.xlu0 %v1807, 3
      %v2095 = vpop.permute.xlu0 %2094
      %2128 = vrot.lane.b32.xlu0 %v1889, 4
      %v2129 = vpop.permute.xlu0 %2128
      %2130 = vrot.lane.b32.xlu0 %v1891, 4
      %v2131 = vpop.permute.xlu0 %2130
      %2132 = vrot.lane.b32.xlu0 %v1893, 4
      %v2133 = vpop.permute.xlu0 %2132
      %2134 = vrot.lane.b32.xlu0 %v1895, 4
      %v2135 = vpop.permute.xlu0 %2134
      %2136 = vrot.lane.b32.xlu0 %v1897, 4
      %v2137 = vpop.permute.xlu0 %2136
      %2138 = vrot.lane.b32.xlu0 %v1899, 4
      %v2139 = vpop.permute.xlu0 %2138
      %2140 = vrot.lane.b32.xlu0 %v1901, 4
      %v2141 = vpop.permute.xlu0 %2140
      %2142 = vrot.lane.b32.xlu0 %v1903, 4
      %v2143 = vpop.permute.xlu0 %2142
      %2144 = vrot.lane.b32.xlu0 %v1905, 4
      %v2145 = vpop.permute.xlu0 %2144
      %2146 = vrot.lane.b32.xlu0 %v1907, 4
      %v2147 = vpop.permute.xlu0 %2146
      %2148 = vrot.lane.b32.xlu0 %v1909, 4
      %v2149 = vpop.permute.xlu0 %2148
      %2150 = vrot.lane.b32.xlu0 %v1911, 4
      %v2151 = vpop.permute.xlu0 %2150
      %2152 = vrot.lane.b32.xlu0 %v1913, 4
      %v2153 = vpop.permute.xlu0 %2152
      %2154 = vrot.lane.b32.xlu0 %v1915, 4
      %v2155 = vpop.permute.xlu0 %2154
      %2156 = vrot.lane.b32.xlu0 %v1917, 4
      %v2157 = vpop.permute.xlu0 %2156
      %2158 = vrot.lane.b32.xlu0 %v1919, 4
      %v2159 = vpop.permute.xlu0 %2158
      %vm2176 = vcmask 7168
      %v2177 = vsel %vm2176, %v1424, %v1937
      %v2178 = vsel %vm2176, %v1425, %v1939
      %v2179 = vsel %vm2176, %v1426, %v1941
      %v2180 = vsel %vm2176, %v1427, %v1943
      %v2181 = vsel %vm2176, %v1428, %v1945
      %v2182 = vsel %vm2176, %v1429, %v1947
      %v2183 = vsel %vm2176, %v1430, %v1949
      %v2184 = vsel %vm2176, %v1431, %v1951
      %v2185 = vsel %vm2176, %v1432, %v1953
      %v2186 = vsel %vm2176, %v1433, %v1955
      %v2187 = vsel %vm2176, %v1434, %v1957
      %v2188 = vsel %vm2176, %v1435, %v1959
      %v2189 = vsel %vm2176, %v1436, %v1961
      %v2190 = vsel %vm2176, %v1437, %v1963
      %v2191 = vsel %vm2176, %v1438, %v1965
      %v2192 = vsel %vm2176, %v1439, %v1967
      %vm2193 = vcmask 15360
      %v2194 = vsel %vm2193, %v2177, %v2001
      %v2195 = vsel %vm2193, %v2178, %v2003
      %v2196 = vsel %vm2193, %v2179, %v2005
      %v2197 = vsel %vm2193, %v2180, %v2007
      %v2198 = vsel %vm2193, %v2181, %v2009
      %v2199 = vsel %vm2193, %v2182, %v2011
      %v2200 = vsel %vm2193, %v2183, %v2013
      %v2201 = vsel %vm2193, %v2184, %v2015
      %v2202 = vsel %vm2193, %v2185, %v2017
      %v2203 = vsel %vm2193, %v2186, %v2019
      %v2204 = vsel %vm2193, %v2187, %v2021
      %v2205 = vsel %vm2193, %v2188, %v2023
      %v2206 = vsel %vm2193, %v2189, %v2025
      %v2207 = vsel %vm2193, %v2190, %v2027
      %v2208 = vsel %vm2193, %v2191, %v2029
      %v2209 = vsel %vm2193, %v2192, %v2031
      %vm2210 = vcmask 23552
      %v2211 = vsel %vm2210, %v2194, %v2065
      %v2212 = vsel %vm2210, %v2195, %v2067
      %v2213 = vsel %vm2210, %v2196, %v2069
      %v2214 = vsel %vm2210, %v2197, %v2071
      %v2215 = vsel %vm2210, %v2198, %v2073
      %v2216 = vsel %vm2210, %v2199, %v2075
      %v2217 = vsel %vm2210, %v2200, %v2077
      %v2218 = vsel %vm2210, %v2201, %v2079
      %v2219 = vsel %vm2210, %v2202, %v2081
      %v2220 = vsel %vm2210, %v2203, %v2083
      %v2221 = vsel %vm2210, %v2204, %v2085
      %v2222 = vsel %vm2210, %v2205, %v2087
      %v2223 = vsel %vm2210, %v2206, %v2089
      %v2224 = vsel %vm2210, %v2207, %v2091
      %v2225 = vsel %vm2210, %v2208, %v2093
      %v2226 = vsel %vm2210, %v2209, %v2095
      %vm2227 = vcmask 31744
      %v2228 = vsel %vm2227, %v2211, %v2129
      %v2229 = vsel %vm2227, %v2212, %v2131
      %v2230 = vsel %vm2227, %v2213, %v2133
      %v2231 = vsel %vm2227, %v2214, %v2135
      %v2232 = vsel %vm2227, %v2215, %v2137
      %v2233 = vsel %vm2227, %v2216, %v2139
      %v2234 = vsel %vm2227, %v2217, %v2141
      %v2235 = vsel %vm2227, %v2218, %v2143
      %v2236 = vsel %vm2227, %v2219, %v2145
      %v2237 = vsel %vm2227, %v2220, %v2147
      %v2238 = vsel %vm2227, %v2221, %v2149
      %v2239 = vsel %vm2227, %v2222, %v2151
      %v2240 = vsel %vm2227, %v2223, %v2153
      %v2241 = vsel %vm2227, %v2224, %v2155
      %v2242 = vsel %vm2227, %v2225, %v2157
      %v2243 = vsel %vm2227, %v2226, %v2159
      %vm2244 = vcmask 39936
      %v2245 = vsel %vm2244, %v2228, 0.0
      %v2246 = vsel %vm2244, %v2229, 0.0
      %v2247 = vsel %vm2244, %v2230, 0.0
      %v2248 = vsel %vm2244, %v2231, 0.0
      %v2249 = vsel %vm2244, %v2232, 0.0
      %v2250 = vsel %vm2244, %v2233, 0.0
      %v2251 = vsel %vm2244, %v2234, 0.0
      %v2252 = vsel %vm2244, %v2235, 0.0
      %v2253 = vsel %vm2244, %v2236, 0.0
      %v2254 = vsel %vm2244, %v2237, 0.0
      %v2255 = vsel %vm2244, %v2238, 0.0
      %v2256 = vsel %vm2244, %v2239, 0.0
      %v2257 = vsel %vm2244, %v2240, 0.0
      %v2258 = vsel %vm2244, %v2241, 0.0
      %v2259 = vsel %vm2244, %v2242, 0.0
      %v2260 = vsel %vm2244, %v2243, 0.0
      %v2261 = vlaneseq
      %v2262 = vshrl.u32 %v2261, 7
      %v2263 = vadd.s32 %v2262, 8
      %v2264 = vadd.s32 %v2262, 16
      %v2265 = vadd.s32 %v2262, 24
      %v2266 = vadd.s32 %v2262, 32
      %v2267 = vadd.s32 %v2262, 40
      %v2268 = vadd.s32 %v2262, 48
      %v2269 = vadd.s32 %v2262, 56
      %v2270 = vadd.s32 %v2262, 64
      %v2271 = vadd.s32 %v2262, 72
      %v2272 = vadd.s32 %v2262, 80
      %v2273 = vadd.s32 %v2262, 88
      %v2274 = vadd.s32 %v2262, 96
      %v2275 = vadd.s32 %v2262, 104
      %v2276 = vadd.s32 %v2262, 112
      %v2277 = vadd.s32 %v2262, 120
      %s2278 = smul.u32 %s13, 128
      %v2279 = vstv %s2278
      %v2280 = vadd.s32 %v2262, %v2279
      %v2281 = vadd.s32 %v2263, %v2279
      %v2282 = vadd.s32 %v2264, %v2279
      %v2283 = vadd.s32 %v2265, %v2279
      %v2284 = vadd.s32 %v2266, %v2279
      %v2285 = vadd.s32 %v2267, %v2279
      %v2286 = vadd.s32 %v2268, %v2279
      %v2287 = vadd.s32 %v2269, %v2279
      %v2288 = vadd.s32 %v2270, %v2279
      %v2289 = vadd.s32 %v2271, %v2279
      %v2290 = vadd.s32 %v2272, %v2279
      %v2291 = vadd.s32 %v2273, %v2279
      %v2292 = vadd.s32 %v2274, %v2279
      %v2293 = vadd.s32 %v2275, %v2279
      %v2294 = vadd.s32 %v2276, %v2279
      %v2295 = vadd.s32 %v2277, %v2279
      %vm2296 = vcmp.lt.s32.totalorder %v2280, 200
      %vm2297 = vcmp.lt.s32.totalorder %v2281, 200
      %vm2298 = vcmp.lt.s32.totalorder %v2282, 200
      %vm2299 = vcmp.lt.s32.totalorder %v2283, 200
      %vm2300 = vcmp.lt.s32.totalorder %v2284, 200
      %vm2301 = vcmp.lt.s32.totalorder %v2285, 200
      %vm2302 = vcmp.lt.s32.totalorder %v2286, 200
      %vm2303 = vcmp.lt.s32.totalorder %v2287, 200
      %vm2304 = vcmp.lt.s32.totalorder %v2288, 200
      %vm2305 = vcmp.lt.s32.totalorder %v2289, 200
      %vm2306 = vcmp.lt.s32.totalorder %v2290, 200
      %vm2307 = vcmp.lt.s32.totalorder %v2291, 200
      %vm2308 = vcmp.lt.s32.totalorder %v2292, 200
      %vm2309 = vcmp.lt.s32.totalorder %v2293, 200
      %vm2310 = vcmp.lt.s32.totalorder %v2294, 200
      %vm2311 = vcmp.lt.s32.totalorder %v2295, 200
      %v2312 = vsel %vm2296, %v2245, 0.0
      %v2313 = vsel %vm2297, %v2246, 0.0
      %v2314 = vsel %vm2298, %v2247, 0.0
      %v2315 = vsel %vm2299, %v2248, 0.0
      %v2316 = vsel %vm2300, %v2249, 0.0
      %v2317 = vsel %vm2301, %v2250, 0.0
      %v2318 = vsel %vm2302, %v2251, 0.0
      %v2319 = vsel %vm2303, %v2252, 0.0
      %v2320 = vsel %vm2304, %v2253, 0.0
      %v2321 = vsel %vm2305, %v2254, 0.0
      %v2322 = vsel %vm2306, %v2255, 0.0
      %v2323 = vsel %vm2307, %v2256, 0.0
      %v2324 = vsel %vm2308, %v2257, 0.0
      %v2325 = vsel %vm2309, %v2258, 0.0
      %v2326 = vsel %vm2310, %v2259, 0.0
      %v2327 = vsel %vm2311, %v2260, 0.0
      %v2328 = vld [vmem:[#allocation2] sm:$0x1]
      %v2329 = vsel %vm159, %v2312, 0.0
      %v2330 = vsel %vm159, %v2313, 0.0
      %v2331 = vadd.f32 %v2329, %v2330
      %v2332 = vsel %vm159, %v2314, 0.0
      %v2333 = vadd.f32 %v2331, %v2332
      %v2334 = vsel %vm159, %v2315, 0.0
      %v2335 = vadd.f32 %v2333, %v2334
      %v2336 = vsel %vm159, %v2316, 0.0
      %v2337 = vadd.f32 %v2335, %v2336
      %v2338 = vsel %vm159, %v2317, 0.0
      %v2339 = vadd.f32 %v2337, %v2338
      %v2340 = vsel %vm159, %v2318, 0.0
      %v2341 = vadd.f32 %v2339, %v2340
      %v2342 = vsel %vm159, %v2319, 0.0
      %v2343 = vadd.f32 %v2341, %v2342
      %v2344 = vsel %vm159, %v2320, 0.0
      %v2345 = vadd.f32 %v2343, %v2344
      %v2346 = vsel %vm159, %v2321, 0.0
      %v2347 = vadd.f32 %v2345, %v2346
      %v2348 = vsel %vm159, %v2322, 0.0
      %v2349 = vadd.f32 %v2347, %v2348
      %v2350 = vsel %vm159, %v2323, 0.0
      %v2351 = vadd.f32 %v2349, %v2350
      %v2352 = vsel %vm159, %v2324, 0.0
      %v2353 = vadd.f32 %v2351, %v2352
      %v2354 = vsel %vm159, %v2325, 0.0
      %v2355 = vadd.f32 %v2353, %v2354
      %v2356 = vsel %vm159, %v2326, 0.0
      %v2357 = vadd.f32 %v2355, %v2356
      %v2358 = vsel %vm159, %v2327, 0.0
      %v2359 = vadd.f32 %v2357, %v2358
      %v2360 = vrot.slane %v2359, 4
      %v2361 = vadd.f32 %v2359, %v2360
      %v2362 = vrot.slane %v2361, 2
      %v2363 = vadd.f32 %v2361, %v2362
      %v2364 = vrot.slane %v2363, 1
      %v2365 = vadd.f32 %v2363, %v2364
      %v2366 = vadd.f32 %v2328, %v2365
      %vm2367 = vcmask 57344
      %2368 = vst.msk [vmem:[#allocation2] sm:$0x1] %vm2367, %v2366
      %p2369 = scmp.eq.s32.totalorder %s13, 1
      // Predicated region
      $region33: #{losses_forward.1} parent=27 // pred_check
        %p2370 = pneg %p2369
      $region34: #{losses_forward.1} parent=27 // pred_check_branch
        %2372 = sbr.rel (%p2370) target = $region36
      $region35: #{losses_forward.1} parent=27 // pred_region
        %v2373 = vld [vmem:[#allocation2] sm:$0x1]
        %v2374 = vmul.f32 %v2373, 0.005
        %v2375 = vadd.f32 %v2374, 1e-12
        %2377 = vrot.lane.b32.xlu0 %v2375, 127
        %v2378 = vpop.permute.xlu0 %2377
        %v2380 = vrcp.pop %v2378
        %v2381 = vmul.f32 %v2374, %v2380
        %v2382 = vmul.f32 %v2381, 2.0
        %v2383 = vmul.f32 %v2382, %v2374
        %2385 = vrot.lane.b32.xlu0 %v2383, 2
        %v2386 = vpop.permute.xlu0 %2385
        %v2388 = vsub.f32 %v2374, %v2386
        %v2389 = vmul.f32 %v2381, %v2381
        %2391 = vrot.lane.b32.xlu0 %v2374, 127
        %v2392 = vpop.permute.xlu0 %2391
        %v2394 = vmul.f32 %v2389, %v2392
        %2396 = vrot.lane.b32.xlu0 %v2394, 2
        %v2397 = vpop.permute.xlu0 %2396
        %v2399 = vadd.f32 %v2388, %v2397
        %v2400 = vsub.f32 %v2374, 1.0
        %v2401 = vmul.f32 %v2400, %v2400
        %v2402 = vadd.f32 %v2399, %v2392
        %2404 = vrot.lane.b32.xlu0 %v2401, 126
        %v2405 = vpop.permute.xlu0 %2404
        %v2407 = vadd.f32 %v2402, %v2405
        %v2408 = vlaneseq
        %v2409 = vand.u32 %v2408, 127
        %vm2410 = vcmp.eq.s32.totalorder %v2409, 0
        %2412 = vset.pattern.permute.xlu0 2
        %2413 = vperm.xlu0 %2412, %v2407
        %v2414 = vpop.permute.xlu0 %2413
        %v2416 = vlaneseq
        %v2417 = vshrl.u32 %v2416, 7
        %v2418 = vsub.s32 0, %v2417
        %v2419 = vrot.slane %v2414, %v2418
        %v2420 = vsel %vm2410, %v2419, 0.0
        %vm2421 = vcmp.eq.s32.totalorder %v2409, 1
        %2423 = vset.pattern.permute.xlu0 2
        %2424 = vperm.xlu0 %2423, %v2399
        %v2425 = vpop.permute.xlu0 %2424
        %v2427 = vlaneseq
        %v2428 = vshrl.u32 %v2427, 7
        %v2429 = vsub.s32 0, %v2428
        %v2430 = vrot.slane %v2425, %v2429
        %v2431 = vsel %vm2421, %v2430, 0.0
        %v2432 = vadd.f32 %v2420, %v2431
        %vm2433 = vcmp.eq.s32.totalorder %v2409, 2
        %2434 = vset.pattern.permute.xlu0 3
        %2435 = vperm.xlu0 %2434, %v2374
        %v2436 = vpop.permute.xlu0 %2435
        %v2438 = vlaneseq
        %v2439 = vshrl.u32 %v2438, 7
        %v2440 = vsub.s32 0, %v2439
        %v2441 = vrot.slane %v2436, %v2440
        %v2442 = vsel %vm2433, %v2441, 0.0
        %v2443 = vadd.f32 %v2432, %v2442
        %vm2444 = vcmp.eq.s32.totalorder %v2409, 3
        %2445 = vset.pattern.permute.xlu0 4
        %2446 = vperm.xlu0 %2445, %v2401
        %v2447 = vpop.permute.xlu0 %2446
        %v2449 = vlaneseq
        %v2450 = vshrl.u32 %v2449, 7
        %v2451 = vsub.s32 0, %v2450
        %v2452 = vrot.slane %v2447, %v2451
        %v2453 = vsel %vm2444, %v2452, 0.0
        %v2454 = vadd.f32 %v2443, %v2453
        %vm2455 = vcmp.eq.s32.totalorder %v2409, 4
        %2457 = vset.pattern.permute.xlu0 0
        %2458 = vperm.xlu0 %2457, %v2381
        %v2459 = vpop.permute.xlu0 %2458
        %v2461 = vlaneseq
        %v2462 = vshrl.u32 %v2461, 7
        %v2463 = vsub.s32 0, %v2462
        %v2464 = vrot.slane %v2459, %v2463
        %v2465 = vsel %vm2455, %v2464, 0.0
        %v2466 = vadd.f32 %v2454, %v2465
        %2467 = vst.msk [vmem:[%s2] sm:$0x1] %vm2367, %v2466
      $region36: #{losses_forward.1} parent=27 // pred_fallthru
        _
      // Predicated region
      $region37: #{losses_forward.1} parent=27 // pred_check
        %p2468 = pneg %p73
      $region38: #{losses_forward.1} parent=27 // pred_check_branch
        %2470 = sbr.rel (%p2468) target = $region40
      $region39: #{losses_forward.1} parent=27 // pred_region
        _
      $region40: #{losses_forward.1} parent=27 // pred_fallthru
        _
      // Predicated region
      $region41: #{losses_forward.1} parent=27 // pred_check
        %p2471 = pneg %p73
      $region42: #{losses_forward.1} parent=27 // pred_check_branch
        %2473 = sbr.rel (%p2471) target = $region44
      $region43: #{losses_forward.1} parent=27 // pred_region
        _
      $region44: #{losses_forward.1} parent=27 // pred_fallthru
        _
    $region28: #{losses_forward.1} parent=5 // pred_fallthru
      _
    %p2474 = scmp.le.s32.totalorder 2, %s8
    // Predicated region
    $region45: #{losses_forward.1} parent=5 // pred_check
      %p2475 = pneg %p2474
    $region46: #{losses_forward.1} parent=5 // pred_check_branch
      %2477 = sbr.rel (%p2475) target = $region48
    $region47: #{losses_forward.1} parent=5 // pred_region
      %s2478 = ssub.s32 %s8, 2
    $region48: #{losses_forward.1} parent=5 // pred_fallthru
      _
  $region6: #{losses_forward.1} parent=0 // loop_footer
    %s12 = sadd.s32 1, %s8
  $region7: #{losses_forward.1} parent=0 // loop_footer_branch
    %7 = sbr.rel target = $region3
  $region8: #{losses_forward.1} parent=0 // loop_exit
    _

</llo_original>
